<compile_context>
chip_gen: v6e
topology: v6e:2x2x1
jax: 0.10.0
libtpu: 0.0.40
codegen_flags: <defaults>
</compile_context>

<pallas_src>
import functools

import jax
import jax.numpy as jnp
from jax.experimental import pallas as pl
from jax.experimental.pallas import tpu as pltpu


def _round_up(x, m):
    return ((x + m - 1) // m) * m


def _vae_kernel(x_ref, eps_ref,
                w1_ref, b1_ref,
                wmv_ref, bmv_ref,
                w3_ref, b3_ref,
                w4_ref, b4_ref,
                xhat_ref, mlv_ref,
                *, latent_pad):
    # ---- encoder hidden: bf16 matmul, f32 accumulate / elementwise ----
    x = x_ref[...].astype(jnp.bfloat16)                      # (TB, D)
    h = jnp.dot(x, w1_ref[...], preferred_element_type=jnp.float32) + b1_ref[...]
    h = jnp.maximum(h, 0.0)

    # ---- fused (mean | log_var) head: single MXU push, lane-dense output ----
    mlv = jnp.dot(h.astype(jnp.bfloat16), wmv_ref[...],
                  preferred_element_type=jnp.float32) + bmv_ref[...]
    mean = mlv[:, :latent_pad]                               # lane-aligned slice
    log_var = mlv[:, latent_pad:]

    # ---- reparameterization: z = mean + exp(0.5 * log_var) * eps  (f32) ----
    z = mean + jnp.exp(0.5 * log_var) * eps_ref[...]

    # ---- decoder ----
    h2 = jnp.dot(z.astype(jnp.bfloat16), w3_ref[...],
                 preferred_element_type=jnp.float32) + b3_ref[...]
    h2 = jnp.maximum(h2, 0.0)
    logits = jnp.dot(h2.astype(jnp.bfloat16), w4_ref[...],
                     preferred_element_type=jnp.float32) + b4_ref[...]
    # sigmoid via EUP exp + EUP approx reciprocal (keeps VALU slots free)
    x_hat = pl.reciprocal(1.0 + jnp.exp(-logits), approx=True)

    xhat_ref[...] = x_hat.astype(xhat_ref.dtype)
    mlv_ref[...] = mlv.astype(mlv_ref.dtype)


def vae_forward(x_nchw, eps, params):
    """x_nchw: (B, C, H, W) f32; eps: (B, LATENT) f32; params: dict of f32 weights."""
    B, C, H, W = x_nchw.shape
    D = C * H * W
    x = x_nchw.reshape(B, D).astype(jnp.float32)

    latent = params["wm"].shape[1]
    Lp = _round_up(latent, 128)          # lane-dense latent width

    # ---- batch tiling / padding (sublane multiple; 256 tiles for big batches) ----
    tile_b = 256 if B >= 256 else _round_up(B, 8)
    B_pad = _round_up(B, tile_b)
    x_p = jnp.pad(x, ((0, B_pad - B), (0, 0)))
    eps_p = jnp.pad(eps.astype(jnp.float32), ((0, B_pad - B), (0, Lp - latent)))

    # ---- fuse + pad weights; matmul operands in bf16, biases in f32 ----
    def pad_cols(w, n):
        return jnp.pad(w, ((0, 0), (0, n - w.shape[1])))

    w1 = params["w1"].astype(jnp.bfloat16)
    b1 = params["b1"].astype(jnp.float32)
    wmv = jnp.concatenate([pad_cols(params["wm"], Lp),
                           pad_cols(params["wv"], Lp)], axis=1).astype(jnp.bfloat16)
    bmv = jnp.concatenate([pad_cols(params["bm"], Lp),
                           pad_cols(params["bv"], Lp)], axis=1).astype(jnp.float32)
    w3 = jnp.pad(params["w3"], ((0, Lp - latent), (0, 0))).astype(jnp.bfloat16)
    b3 = params["b3"].astype(jnp.float32)
    w4 = params["w4"].astype(jnp.bfloat16)
    b4 = params["b4"].astype(jnp.float32)

    grid = (B_pad // tile_b,)

    def batch_spec(n):
        return pl.BlockSpec((tile_b, n), lambda i: (i, 0))

    def const_spec(shape):
        # same block index every grid step -> weights stay resident in VMEM
        return pl.BlockSpec(shape, lambda i: (0, 0))

    in_specs = [
        batch_spec(D),                       # x
        batch_spec(Lp),                      # eps
        const_spec(w1.shape), const_spec(b1.shape),
        const_spec(wmv.shape), const_spec(bmv.shape),
        const_spec(w3.shape), const_spec(b3.shape),
        const_spec(w4.shape), const_spec(b4.shape),
    ]
    out_specs = (batch_spec(D), batch_spec(2 * Lp))
    out_shape = (
        jax.ShapeDtypeStruct((B_pad, D), jnp.float32),        # x_hat (flattened)
        jax.ShapeDtypeStruct((B_pad, 2 * Lp), jnp.float32),   # packed mean|log_var
    )

    kernel = functools.partial(_vae_kernel, latent_pad=Lp)

    x_hat_p, mlv_p = pl.pallas_call(
        kernel,
        out_shape=out_shape,
        grid_spec=pltpu.PrefetchScalarGridSpec(
            num_scalar_prefetch=0,
            grid=grid,
            in_specs=in_specs,
            out_specs=out_specs,
        ),
        compiler_params=pltpu.CompilerParams(
            dimension_semantics=("parallel",)),
    )(x_p, eps_p, w1, b1, wmv, bmv, w3, b3, w4, b4)

    x_hat = x_hat_p[:B].reshape(B, C, H, W)
    mean = mlv_p[:B, :latent]
    log_var = mlv_p[:B, Lp:Lp + latent]
    return x_hat, mean, log_var


def init_params(key, d_in, hidden, latent):
    ks = jax.random.split(key, 6)

    def glorot(k, fan_in, fan_out):
        scale = jnp.sqrt(2.0 / (fan_in + fan_out))
        return jax.random.normal(k, (fan_in, fan_out), jnp.float32) * scale

    return {
        "w1": glorot(ks[0], d_in, hidden),   "b1": jnp.zeros((1, hidden), jnp.float32),
        "wm": glorot(ks[1], hidden, latent), "bm": jnp.zeros((1, latent), jnp.float32),
        "wv": glorot(ks[2], hidden, latent), "bv": jnp.zeros((1, latent), jnp.float32),
        "w3": glorot(ks[3], latent, hidden), "b3": jnp.zeros((1, hidden), jnp.float32),
        "w4": glorot(ks[4], hidden, d_in),   "b4": jnp.zeros((1, d_in), jnp.float32),
    }


def vae_reference(x_nchw, eps, params):
    """Pure-JAX reference with matching bf16-matmul / f32-accumulate numerics."""
    B = x_nchw.shape[0]
    x = x_nchw.reshape(B, -1)

    def bdot(a, b):
        return jnp.dot(a.astype(jnp.bfloat16), b.astype(jnp.bfloat16),
                       preferred_element_type=jnp.float32)

    h = jnp.maximum(bdot(x, params["w1"]) + params["b1"], 0.0)
    mean = bdot(h, params["wm"]) + params["bm"]
    log_var = bdot(h, params["wv"]) + params["bv"]
    z = mean + jnp.exp(0.5 * log_var) * eps
    h2 = jnp.maximum(bdot(z, params["w3"]) + params["b3"], 0.0)
    x_hat = jax.nn.sigmoid(bdot(h2, params["w4"]) + params["b4"])
    return x_hat.reshape(x_nchw.shape), mean, log_var


if __name__ == "__main__":
    B, C, H, W = 2, 4, 16, 16        # small NCHW input
    HIDDEN, LATENT = 128, 32
    D = C * H * W

    key = jax.random.PRNGKey(0)
    k_x, k_eps, k_p = jax.random.split(key, 3)

    x = jax.nn.sigmoid(jax.random.normal(k_x, (B, C, H, W), jnp.float32))  # [0,1] (BCE domain)
    eps = jax.random.normal(k_eps, (B, LATENT), jnp.float32)               # reparam noise
    params = init_params(k_p, D, HIDDEN, LATENT)

    x_hat, mean, log_var = vae_forward(x, eps, params)
    jax.block_until_ready((x_hat, mean, log_var))

    # sanity check against pure-JAX reference (same bf16 matmul numerics)
    x_hat_ref, mean_ref, log_var_ref = vae_reference(x, eps, params)
    assert jnp.allclose(mean, mean_ref, atol=1e-2), "mean mismatch"
    assert jnp.allclose(log_var, log_var_ref, atol=1e-2), "log_var mismatch"
    assert jnp.allclose(x_hat, x_hat_ref, atol=2e-2), "x_hat mismatch"
    assert x_hat.shape == (B, C, H, W) and mean.shape == (B, LATENT) and log_var.shape == (B, LATENT)

    print("KERNEL_OK")
</pallas_src>

<mosaic_0001>
module attributes {stable_mosaic.version = 11 : i64} {
  func.func @_vae_kernel(%arg0: i32, %arg1: memref<8x1024xf32, #tpu.memory_space<vmem>>, %arg2: memref<8x128xf32, #tpu.memory_space<vmem>>, %arg3: memref<1024x128xbf16, #tpu.memory_space<vmem>>, %arg4: memref<1x128xf32, #tpu.memory_space<vmem>>, %arg5: memref<128x256xbf16, #tpu.memory_space<vmem>>, %arg6: memref<1x256xf32, #tpu.memory_space<vmem>>, %arg7: memref<128x128xbf16, #tpu.memory_space<vmem>>, %arg8: memref<1x128xf32, #tpu.memory_space<vmem>>, %arg9: memref<128x1024xbf16, #tpu.memory_space<vmem>>, %arg10: memref<1x1024xf32, #tpu.memory_space<vmem>>, %arg11: memref<8x1024xf32, #tpu.memory_space<vmem>>, %arg12: memref<8x256xf32, #tpu.memory_space<vmem>>) attributes {dimension_semantics = [#tpu.dimension_semantics<parallel>], iteration_bounds = array<i64: 1>, scalar_prefetch = 0 : i64, scratch_operands = 0 : i64, tpu.core_type = #tpu.core_type<tc>, window_params = [{transform_indices = @transform_0, window_bounds = array<i64: 8, 1024>}, {transform_indices = @transform_1, window_bounds = array<i64: 8, 128>}, {pipeline_mode = #tpu.pipeline_mode<synchronous>, transform_indices = @transform_2, window_bounds = array<i64: 1024, 128>}, {pipeline_mode = #tpu.pipeline_mode<synchronous>, transform_indices = @transform_3, window_bounds = array<i64: 1, 128>}, {pipeline_mode = #tpu.pipeline_mode<synchronous>, transform_indices = @transform_4, window_bounds = array<i64: 128, 256>}, {pipeline_mode = #tpu.pipeline_mode<synchronous>, transform_indices = @transform_5, window_bounds = array<i64: 1, 256>}, {pipeline_mode = #tpu.pipeline_mode<synchronous>, transform_indices = @transform_6, window_bounds = array<i64: 128, 128>}, {pipeline_mode = #tpu.pipeline_mode<synchronous>, transform_indices = @transform_7, window_bounds = array<i64: 1, 128>}, {pipeline_mode = #tpu.pipeline_mode<synchronous>, transform_indices = @transform_8, window_bounds = array<i64: 128, 1024>}, {pipeline_mode = #tpu.pipeline_mode<synchronous>, transform_indices = @transform_9, window_bounds = array<i64: 1, 1024>}, {transform_indices = @transform_10, window_bounds = array<i64: 8, 1024>}, {transform_indices = @transform_11, window_bounds = array<i64: 8, 256>}]} {
    %c0 = arith.constant 0 : index
    %c0_0 = arith.constant 0 : index
    %0 = vector.load %arg1[%c0, %c0_0] : memref<8x1024xf32, #tpu.memory_space<vmem>>, vector<8x1024xf32>
    %1 = arith.truncf %0 : vector<8x1024xf32> to vector<8x1024xbf16>
    %c0_1 = arith.constant 0 : index
    %c0_2 = arith.constant 0 : index
    %2 = vector.load %arg3[%c0_1, %c0_2] : memref<1024x128xbf16, #tpu.memory_space<vmem>>, vector<1024x128xbf16>
    %cst = arith.constant dense<0.000000e+00> : vector<8x128xf32>
    %3 = tpu.matmul %1, %2, %cst {dimension_numbers = #tpu.dot_dimension_numbers<[1], [0], [0], [1], [0, 0, 1, 1], [], []>} : vector<8x1024xbf16>, vector<1024x128xbf16>, vector<8x128xf32> -> vector<8x128xf32>
    %c0_3 = arith.constant 0 : index
    %c0_4 = arith.constant 0 : index
    %4 = vector.load %arg4[%c0_3, %c0_4] : memref<1x128xf32, #tpu.memory_space<vmem>>, vector<1x128xf32>
    %5 = vector.broadcast %4 : vector<1x128xf32> to vector<8x128xf32>
    %6 = arith.addf %3, %5 : vector<8x128xf32>
    %cst_5 = arith.constant 0.000000e+00 : f32
    %7 = vector.broadcast %cst_5 : f32 to vector<8x128xf32>
    %8 = arith.maximumf %6, %7 : vector<8x128xf32>
    %9 = arith.truncf %8 : vector<8x128xf32> to vector<8x128xbf16>
    %c0_6 = arith.constant 0 : index
    %c0_7 = arith.constant 0 : index
    %10 = vector.load %arg5[%c0_6, %c0_7] : memref<128x256xbf16, #tpu.memory_space<vmem>>, vector<128x256xbf16>
    %cst_8 = arith.constant dense<0.000000e+00> : vector<8x256xf32>
    %11 = tpu.matmul %9, %10, %cst_8 {dimension_numbers = #tpu.dot_dimension_numbers<[1], [0], [0], [1], [0, 0, 1, 1], [], []>} : vector<8x128xbf16>, vector<128x256xbf16>, vector<8x256xf32> -> vector<8x256xf32>
    %c0_9 = arith.constant 0 : index
    %c0_10 = arith.constant 0 : index
    %12 = vector.load %arg6[%c0_9, %c0_10] : memref<1x256xf32, #tpu.memory_space<vmem>>, vector<1x256xf32>
    %13 = vector.broadcast %12 : vector<1x256xf32> to vector<8x256xf32>
    %14 = arith.addf %11, %13 : vector<8x256xf32>
    %15 = vector.extract_strided_slice %14 {offsets = [0, 0], sizes = [8, 128], strides = [1, 1]} : vector<8x256xf32> to vector<8x128xf32>
    %16 = vector.extract_strided_slice %14 {offsets = [0, 128], sizes = [8, 128], strides = [1, 1]} : vector<8x256xf32> to vector<8x128xf32>
    %cst_11 = arith.constant 5.000000e-01 : f32
    %17 = vector.broadcast %cst_11 : f32 to vector<8x128xf32>
    %18 = arith.mulf %17, %16 : vector<8x128xf32>
    %19 = math.exp %18 : vector<8x128xf32>
    %c0_12 = arith.constant 0 : index
    %c0_13 = arith.constant 0 : index
    %20 = vector.load %arg2[%c0_12, %c0_13] : memref<8x128xf32, #tpu.memory_space<vmem>>, vector<8x128xf32>
    %21 = arith.mulf %19, %20 : vector<8x128xf32>
    %22 = arith.addf %15, %21 : vector<8x128xf32>
    %23 = arith.truncf %22 : vector<8x128xf32> to vector<8x128xbf16>
    %c0_14 = arith.constant 0 : index
    %c0_15 = arith.constant 0 : index
    %24 = vector.load %arg7[%c0_14, %c0_15] : memref<128x128xbf16, #tpu.memory_space<vmem>>, vector<128x128xbf16>
    %cst_16 = arith.constant dense<0.000000e+00> : vector<8x128xf32>
    %25 = tpu.matmul %23, %24, %cst_16 {dimension_numbers = #tpu.dot_dimension_numbers<[1], [0], [0], [1], [0, 0, 1, 1], [], []>} : vector<8x128xbf16>, vector<128x128xbf16>, vector<8x128xf32> -> vector<8x128xf32>
    %c0_17 = arith.constant 0 : index
    %c0_18 = arith.constant 0 : index
    %26 = vector.load %arg8[%c0_17, %c0_18] : memref<1x128xf32, #tpu.memory_space<vmem>>, vector<1x128xf32>
    %27 = vector.broadcast %26 : vector<1x128xf32> to vector<8x128xf32>
    %28 = arith.addf %25, %27 : vector<8x128xf32>
    %cst_19 = arith.constant 0.000000e+00 : f32
    %29 = vector.broadcast %cst_19 : f32 to vector<8x128xf32>
    %30 = arith.maximumf %28, %29 : vector<8x128xf32>
    %31 = arith.truncf %30 : vector<8x128xf32> to vector<8x128xbf16>
    %c0_20 = arith.constant 0 : index
    %c0_21 = arith.constant 0 : index
    %32 = vector.load %arg9[%c0_20, %c0_21] : memref<128x1024xbf16, #tpu.memory_space<vmem>>, vector<128x1024xbf16>
    %cst_22 = arith.constant dense<0.000000e+00> : vector<8x1024xf32>
    %33 = tpu.matmul %31, %32, %cst_22 {dimension_numbers = #tpu.dot_dimension_numbers<[1], [0], [0], [1], [0, 0, 1, 1], [], []>} : vector<8x128xbf16>, vector<128x1024xbf16>, vector<8x1024xf32> -> vector<8x1024xf32>
    %c0_23 = arith.constant 0 : index
    %c0_24 = arith.constant 0 : index
    %34 = vector.load %arg10[%c0_23, %c0_24] : memref<1x1024xf32, #tpu.memory_space<vmem>>, vector<1x1024xf32>
    %35 = vector.broadcast %34 : vector<1x1024xf32> to vector<8x1024xf32>
    %36 = arith.addf %33, %35 : vector<8x1024xf32>
    %cst_25 = arith.constant 0.000000e+00 : f32
    %37 = vector.broadcast %cst_25 : f32 to vector<8x1024xf32>
    %38 = arith.subf %37, %36 : vector<8x1024xf32>
    %39 = math.exp %38 : vector<8x1024xf32>
    %cst_26 = arith.constant 1.000000e+00 : f32
    %40 = vector.broadcast %cst_26 : f32 to vector<8x1024xf32>
    %41 = arith.addf %40, %39 : vector<8x1024xf32>
    %42 = tpu.reciprocal %41 {approx = true} : vector<8x1024xf32> -> vector<8x1024xf32>
    %c0_27 = arith.constant 0 : index
    %c0_28 = arith.constant 0 : index
    %43 = vector.load %arg11[%c0_27, %c0_28] : memref<8x1024xf32, #tpu.memory_space<vmem>>, vector<8x1024xf32>
    tpu.vector_store %arg11[%c0_27, %c0_28], %42 {strides = array<i32>} : memref<8x1024xf32, #tpu.memory_space<vmem>>, vector<8x1024xf32>,
    %c0_29 = arith.constant 0 : index
    %c0_30 = arith.constant 0 : index
    %44 = vector.load %arg12[%c0_29, %c0_30] : memref<8x256xf32, #tpu.memory_space<vmem>>, vector<8x256xf32>
    tpu.vector_store %arg12[%c0_29, %c0_30], %14 {strides = array<i32>} : memref<8x256xf32, #tpu.memory_space<vmem>>, vector<8x256xf32>,
    return
  }
  func.func @transform_0(%arg0: i32) -> (i32, i32) {
    %c0_i32 = arith.constant 0 : i32
    %c0_i32_0 = arith.constant 0 : i32
    return %arg0, %c0_i32 : i32, i32
  }
  func.func @transform_1(%arg0: i32) -> (i32, i32) {
    %c0_i32 = arith.constant 0 : i32
    %c0_i32_0 = arith.constant 0 : i32
    return %arg0, %c0_i32 : i32, i32
  }
  func.func @transform_2(%arg0: i32) -> (i32, i32) {
    %c0_i32 = arith.constant 0 : i32
    %c0_i32_0 = arith.constant 0 : i32
    %c0_i32_1 = arith.constant 0 : i32
    return %c0_i32, %c0_i32_0 : i32, i32
  }
  func.func @transform_3(%arg0: i32) -> (i32, i32) {
    %c0_i32 = arith.constant 0 : i32
    %c0_i32_0 = arith.constant 0 : i32
    %c0_i32_1 = arith.constant 0 : i32
    return %c0_i32, %c0_i32_0 : i32, i32
  }
  func.func @transform_4(%arg0: i32) -> (i32, i32) {
    %c0_i32 = arith.constant 0 : i32
    %c0_i32_0 = arith.constant 0 : i32
    %c0_i32_1 = arith.constant 0 : i32
    return %c0_i32, %c0_i32_0 : i32, i32
  }
  func.func @transform_5(%arg0: i32) -> (i32, i32) {
    %c0_i32 = arith.constant 0 : i32
    %c0_i32_0 = arith.constant 0 : i32
    %c0_i32_1 = arith.constant 0 : i32
    return %c0_i32, %c0_i32_0 : i32, i32
  }
  func.func @transform_6(%arg0: i32) -> (i32, i32) {
    %c0_i32 = arith.constant 0 : i32
    %c0_i32_0 = arith.constant 0 : i32
    %c0_i32_1 = arith.constant 0 : i32
    return %c0_i32, %c0_i32_0 : i32, i32
  }
  func.func @transform_7(%arg0: i32) -> (i32, i32) {
    %c0_i32 = arith.constant 0 : i32
    %c0_i32_0 = arith.constant 0 : i32
    %c0_i32_1 = arith.constant 0 : i32
    return %c0_i32, %c0_i32_0 : i32, i32
  }
  func.func @transform_8(%arg0: i32) -> (i32, i32) {
    %c0_i32 = arith.constant 0 : i32
    %c0_i32_0 = arith.constant 0 : i32
    %c0_i32_1 = arith.constant 0 : i32
    return %c0_i32, %c0_i32_0 : i32, i32
  }
  func.func @transform_9(%arg0: i32) -> (i32, i32) {
    %c0_i32 = arith.constant 0 : i32
    %c0_i32_0 = arith.constant 0 : i32
    %c0_i32_1 = arith.constant 0 : i32
    return %c0_i32, %c0_i32_0 : i32, i32
  }
  func.func @transform_10(%arg0: i32) -> (i32, i32) {
    %c0_i32 = arith.constant 0 : i32
    %c0_i32_0 = arith.constant 0 : i32
    return %arg0, %c0_i32 : i32, i32
  }
  func.func @transform_11(%arg0: i32) -> (i32, i32) {
    %c0_i32 = arith.constant 0 : i32
    %c0_i32_0 = arith.constant 0 : i32
    return %arg0, %c0_i32 : i32, i32
  }
}

</mosaic_0001>

<llo_original>
// kernel: tpu_custom_call.1
$region0: #{tpu_custom_call.1}
  #allocation0 [shape = 'u32[]', space=smem, size = 0x4, offset = 0x4, fixed_abs, tag = 'smem constant byte address 0x4 - core index']
  #allocation1 [shape = 'u32[144,128]{1,0:T(1,128)}', space=vmem, size = 0x12000, scoped, tag = 'internal scratch']
  %s0 = inlined_call_operand.hbm [shape: f32[8,1024], index: 0, kind: input, shape index: {}]
  %s1 = inlined_call_operand.hbm [shape: f32[8,128], index: 1, kind: input, shape index: {}]
  %s2 = inlined_call_operand.hbm [shape: bf16[1024,128], index: 2, kind: input, shape index: {}]
  %s3 = inlined_call_operand.vmem [shape: f32[1,128], index: 3, kind: input, shape index: {}]
  %s4 = inlined_call_operand.hbm [shape: bf16[128,256], index: 4, kind: input, shape index: {}]
  %s5 = inlined_call_operand.vmem [shape: f32[1,256], index: 5, kind: input, shape index: {}]
  %s6 = inlined_call_operand.hbm [shape: bf16[128,128], index: 6, kind: input, shape index: {}]
  %s7 = inlined_call_operand.vmem [shape: f32[1,128], index: 7, kind: input, shape index: {}]
  %s8 = inlined_call_operand.hbm [shape: bf16[128,1024], index: 8, kind: input, shape index: {}]
  %s9 = inlined_call_operand.vmem [shape: f32[1,1024], index: 9, kind: input, shape index: {}]
  %s10 = inlined_call_operand.hbm [shape: f32[8,1024], index: 10, kind: output, shape index: {0}]
  %s11 = inlined_call_operand.hbm [shape: f32[8,256], index: 11, kind: output, shape index: {1}]
  %12 = xla_tuple %s10, %s11
  %s13 = sld [smem:[#allocation0]]
  $region82: #{tpu_custom_call.1} parent=0
    _
  %s15 = ssub.s32 1, %s13
  %s16 = scalar_select 0, %s15, %s13
  $region1: #{tpu_custom_call.1} parent=0
    #allocation2 [shape = 'u8[32768]{0}', space=vmem, size = 0x8000, scoped, tag = 'input window, operand 0, single buffered']
    #allocation3 [shape = 's32[1]{0}', space=sflag, size = 0x4, scoped, tag = 'scoped memory for tpu_custom_call.1']
    #allocation4 [shape = 's32[1]{0}', space=sflag, size = 0x4, scoped, tag = 'scoped memory for tpu_custom_call.1']
    #allocation5 [shape = 'u8[4096]{0}', space=vmem, size = 0x1000, scoped, tag = 'input window, operand 1, single buffered']
    #allocation6 [shape = 's32[1]{0}', space=sflag, size = 0x4, scoped, tag = 'scoped memory for tpu_custom_call.1']
    #allocation7 [shape = 'u8[262144]{0}', space=vmem, size = 0x40000, scoped, tag = 'input window, operand 2, single buffered']
    #allocation8 [shape = 'u8[65536]{0}', space=vmem, size = 0x10000, scoped, tag = 'input window, operand 4, single buffered']
    #allocation9 [shape = 's32[1]{0}', space=sflag, size = 0x4, scoped, tag = 'scoped memory for tpu_custom_call.1']
    #allocation10 [shape = 'u8[32768]{0}', space=vmem, size = 0x8000, scoped, tag = 'input window, operand 6, single buffered']
    #allocation11 [shape = 'u8[262144]{0}', space=vmem, size = 0x40000, scoped, tag = 'input window, operand 8, single buffered']
    #allocation12 [shape = 's32[1]{0}', space=sflag, size = 0x4, scoped, tag = 'scoped memory for tpu_custom_call.1']
    #allocation13 [shape = 'u8[32768]{0}', space=vmem, size = 0x8000, scoped, tag = 'output window, operand 0, single buffered']
    #allocation14 [shape = 'u8[8192]{0}', space=vmem, size = 0x2000, scoped, tag = 'output window, operand 1, single buffered']
    #allocation15 [shape = 's32[1]{0}', space=sflag, size = 0x4, scoped, tag = 'scoped memory for tpu_custom_call.1']
    %17 = vsyncpa [#allocation3], 0
    %18 = vsyncpa [#allocation6], 0
    %19 = vsyncpa [#allocation9], 0
    %20 = vsyncpa [#allocation12], 0
    %21 = vsyncpa [#allocation4], 0
    %22 = vsyncpa [#allocation15], 0
    // Predicated region
    $region2: #{tpu_custom_call.1} parent=1 // pred_check
      _
    $region3: #{tpu_custom_call.1} parent=1 // pred_check_branch
      %24 = sbr.rel (0) target = $region5
    $region4: #{tpu_custom_call.1} parent=1 // pred_region
      %s26 = ssub.s32 1024, 1024
      %27 = vsyncadd [#allocation3], %s26
      %s29 = sshll.u32 [#allocation2], 4
      %s30 = int_to_ptr.vmem [resolvable:$true] %s29
      %32 = dma.hbm_to_vmem [thread:$0]  %s0, 1024, %s30, [#allocation3]
    $region5: #{tpu_custom_call.1} parent=1 // pred_fallthru
      _
    // Predicated region
    $region6: #{tpu_custom_call.1} parent=1 // pred_check
      _
    $region7: #{tpu_custom_call.1} parent=1 // pred_check_branch
      %34 = sbr.rel (0) target = $region9
    $region8: #{tpu_custom_call.1} parent=1 // pred_region
      %s36 = ssub.s32 128, 128
      %37 = vsyncadd [#allocation6], %s36
      %s39 = sshll.u32 [#allocation5], 4
      %s40 = int_to_ptr.vmem [resolvable:$true] %s39
      %42 = dma.hbm_to_vmem [thread:$0]  %s1, 128, %s40, [#allocation6]
    $region9: #{tpu_custom_call.1} parent=1 // pred_fallthru
      _
    // Predicated region
    $region10: #{tpu_custom_call.1} parent=1 // pred_check
      _
    $region11: #{tpu_custom_call.1} parent=1 // pred_check_branch
      %44 = sbr.rel (0) target = $region13
    $region12: #{tpu_custom_call.1} parent=1 // pred_region
      %s46 = ssub.s32 8192, 8192
      %47 = vsyncadd [#allocation6], %s46
      %s48 = sshll.u32 [#allocation7], 4
      %s49 = int_to_ptr.vmem [resolvable:$true] %s48
      %54 = dma.hbm_to_vmem [thread:$0]  %s2, 8192, %s49, [#allocation6], 64, 64, 4
    $region13: #{tpu_custom_call.1} parent=1 // pred_fallthru
      _
    // Predicated region
    $region14: #{tpu_custom_call.1} parent=1 // pred_check
      _
    $region15: #{tpu_custom_call.1} parent=1 // pred_check_branch
      %56 = sbr.rel (0) target = $region17
    $region16: #{tpu_custom_call.1} parent=1 // pred_region
      _
    $region17: #{tpu_custom_call.1} parent=1 // pred_fallthru
      _
    // Predicated region
    $region18: #{tpu_custom_call.1} parent=1 // pred_check
      _
    $region19: #{tpu_custom_call.1} parent=1 // pred_check_branch
      %58 = sbr.rel (0) target = $region21
    $region20: #{tpu_custom_call.1} parent=1 // pred_region
      %s60 = ssub.s32 2048, 2048
      %61 = vsyncadd [#allocation9], %s60
      %s62 = sshll.u32 [#allocation8], 4
      %s63 = int_to_ptr.vmem [resolvable:$true] %s62
      %68 = dma.hbm_to_vmem [thread:$0]  %s4, 2048, %s63, [#allocation9], 128, 128, 8
    $region21: #{tpu_custom_call.1} parent=1 // pred_fallthru
      _
    // Predicated region
    $region22: #{tpu_custom_call.1} parent=1 // pred_check
      _
    $region23: #{tpu_custom_call.1} parent=1 // pred_check_branch
      %70 = sbr.rel (0) target = $region25
    $region24: #{tpu_custom_call.1} parent=1 // pred_region
      _
    $region25: #{tpu_custom_call.1} parent=1 // pred_fallthru
      _
    // Predicated region
    $region26: #{tpu_custom_call.1} parent=1 // pred_check
      _
    $region27: #{tpu_custom_call.1} parent=1 // pred_check_branch
      %72 = sbr.rel (0) target = $region29
    $region28: #{tpu_custom_call.1} parent=1 // pred_region
      %s74 = ssub.s32 1024, 1024
      %75 = vsyncadd [#allocation9], %s74
      %s76 = sshll.u32 [#allocation10], 4
      %s77 = int_to_ptr.vmem [resolvable:$true] %s76
      %82 = dma.hbm_to_vmem [thread:$0]  %s6, 1024, %s77, [#allocation9], 64, 64, 4
    $region29: #{tpu_custom_call.1} parent=1 // pred_fallthru
      _
    // Predicated region
    $region30: #{tpu_custom_call.1} parent=1 // pred_check
      _
    $region31: #{tpu_custom_call.1} parent=1 // pred_check_branch
      %84 = sbr.rel (0) target = $region33
    $region32: #{tpu_custom_call.1} parent=1 // pred_region
      _
    $region33: #{tpu_custom_call.1} parent=1 // pred_fallthru
      _
    // Predicated region
    $region34: #{tpu_custom_call.1} parent=1 // pred_check
      _
    $region35: #{tpu_custom_call.1} parent=1 // pred_check_branch
      %86 = sbr.rel (0) target = $region37
    $region36: #{tpu_custom_call.1} parent=1 // pred_region
      %s88 = ssub.s32 8192, 8192
      %89 = vsyncadd [#allocation12], %s88
      %s90 = sshll.u32 [#allocation11], 4
      %s91 = int_to_ptr.vmem [resolvable:$true] %s90
      %96 = dma.hbm_to_vmem [thread:$0]  %s8, 8192, %s91, [#allocation12], 512, 512, 32
    $region37: #{tpu_custom_call.1} parent=1 // pred_fallthru
      _
    // Predicated region
    $region38: #{tpu_custom_call.1} parent=1 // pred_check
      _
    $region39: #{tpu_custom_call.1} parent=1 // pred_check_branch
      %98 = sbr.rel (0) target = $region41
    $region40: #{tpu_custom_call.1} parent=1 // pred_region
      _
    $region41: #{tpu_custom_call.1} parent=1 // pred_fallthru
      _
    // Predicated region
    $region42: #{tpu_custom_call.1} parent=1 // pred_check
      _
    $region43: #{tpu_custom_call.1} parent=1 // pred_check_branch
      %100 = sbr.rel (0) target = $region45
    $region44: #{tpu_custom_call.1} parent=1 // pred_region
      %101 = dma.done [#allocation3], 1024
    $region45: #{tpu_custom_call.1} parent=1 // pred_fallthru
      _
    // Predicated region
    $region46: #{tpu_custom_call.1} parent=1 // pred_check
      _
    $region47: #{tpu_custom_call.1} parent=1 // pred_check_branch
      %103 = sbr.rel (0) target = $region49
    $region48: #{tpu_custom_call.1} parent=1 // pred_region
      %104 = dma.done [#allocation6], 128
    $region49: #{tpu_custom_call.1} parent=1 // pred_fallthru
      _
    // Predicated region
    $region50: #{tpu_custom_call.1} parent=1 // pred_check
      _
    $region51: #{tpu_custom_call.1} parent=1 // pred_check_branch
      %106 = sbr.rel (0) target = $region53
    $region52: #{tpu_custom_call.1} parent=1 // pred_region
      %107 = dma.done [#allocation6], 8192
    $region53: #{tpu_custom_call.1} parent=1 // pred_fallthru
      _
    // Predicated region
    $region54: #{tpu_custom_call.1} parent=1 // pred_check
      _
    $region55: #{tpu_custom_call.1} parent=1 // pred_check_branch
      %109 = sbr.rel (0) target = $region57
    $region56: #{tpu_custom_call.1} parent=1 // pred_region
      %110 = dma.done [#allocation9], 2048
    $region57: #{tpu_custom_call.1} parent=1 // pred_fallthru
      _
    // Predicated region
    $region58: #{tpu_custom_call.1} parent=1 // pred_check
      _
    $region59: #{tpu_custom_call.1} parent=1 // pred_check_branch
      %112 = sbr.rel (0) target = $region61
    $region60: #{tpu_custom_call.1} parent=1 // pred_region
      %113 = dma.done [#allocation9], 1024
    $region61: #{tpu_custom_call.1} parent=1 // pred_fallthru
      _
    // Predicated region
    $region62: #{tpu_custom_call.1} parent=1 // pred_check
      _
    $region63: #{tpu_custom_call.1} parent=1 // pred_check_branch
      %115 = sbr.rel (0) target = $region65
    $region64: #{tpu_custom_call.1} parent=1 // pred_region
      %116 = dma.done [#allocation12], 8192
    $region65: #{tpu_custom_call.1} parent=1 // pred_fallthru
      _
    %v118 = vld [vmem:[#allocation2] sm:$0xff]
    %v119 = vld [vmem:[#allocation2 + $0x8] sm:$0xff]
    %v120 = vld [vmem:[#allocation2 + $0x10] sm:$0xff]
    %v121 = vld [vmem:[#allocation2 + $0x18] sm:$0xff]
    %v122 = vld [vmem:[#allocation2 + $0x20] sm:$0xff]
    %v123 = vld [vmem:[#allocation2 + $0x28] sm:$0xff]
    %v124 = vld [vmem:[#allocation2 + $0x30] sm:$0xff]
    %v125 = vld [vmem:[#allocation2 + $0x38] sm:$0xff]
    %v126 = vpack.c.bf16 %v118, %v118
    %v127 = vpack.c.bf16 %v119, %v119
    %v128 = vpack.c.bf16 %v120, %v120
    %v129 = vpack.c.bf16 %v121, %v121
    %v130 = vpack.c.bf16 %v122, %v122
    %v131 = vpack.c.bf16 %v123, %v123
    %v132 = vpack.c.bf16 %v124, %v124
    %v133 = vpack.c.bf16 %v125, %v125
    %v134 = vld [vmem:[#allocation7] sm:$0xf]
    %v135 = vld [vmem:[#allocation7 + $0x4] sm:$0xf]
    %v136 = vld [vmem:[#allocation7 + $0x8] sm:$0xf]
    %v137 = vld [vmem:[#allocation7 + $0xc] sm:$0xf]
    %v138 = vld [vmem:[#allocation7 + $0x10] sm:$0xf]
    %v139 = vld [vmem:[#allocation7 + $0x14] sm:$0xf]
    %v140 = vld [vmem:[#allocation7 + $0x18] sm:$0xf]
    %v141 = vld [vmem:[#allocation7 + $0x1c] sm:$0xf]
    %v142 = vld [vmem:[#allocation7 + $0x20] sm:$0xf]
    %v143 = vld [vmem:[#allocation7 + $0x24] sm:$0xf]
    %v144 = vld [vmem:[#allocation7 + $0x28] sm:$0xf]
    %v145 = vld [vmem:[#allocation7 + $0x2c] sm:$0xf]
    %v146 = vld [vmem:[#allocation7 + $0x30] sm:$0xf]
    %v147 = vld [vmem:[#allocation7 + $0x34] sm:$0xf]
    %v148 = vld [vmem:[#allocation7 + $0x38] sm:$0xf]
    %v149 = vld [vmem:[#allocation7 + $0x3c] sm:$0xf]
    %v150 = vld [vmem:[#allocation7 + $0x40] sm:$0xf]
    %v151 = vld [vmem:[#allocation7 + $0x44] sm:$0xf]
    %v152 = vld [vmem:[#allocation7 + $0x48] sm:$0xf]
    %v153 = vld [vmem:[#allocation7 + $0x4c] sm:$0xf]
    %v154 = vld [vmem:[#allocation7 + $0x50] sm:$0xf]
    %v155 = vld [vmem:[#allocation7 + $0x54] sm:$0xf]
    %v156 = vld [vmem:[#allocation7 + $0x58] sm:$0xf]
    %v157 = vld [vmem:[#allocation7 + $0x5c] sm:$0xf]
    %v158 = vld [vmem:[#allocation7 + $0x60] sm:$0xf]
    %v159 = vld [vmem:[#allocation7 + $0x64] sm:$0xf]
    %v160 = vld [vmem:[#allocation7 + $0x68] sm:$0xf]
    %v161 = vld [vmem:[#allocation7 + $0x6c] sm:$0xf]
    %v162 = vld [vmem:[#allocation7 + $0x70] sm:$0xf]
    %v163 = vld [vmem:[#allocation7 + $0x74] sm:$0xf]
    %v164 = vld [vmem:[#allocation7 + $0x78] sm:$0xf]
    %v165 = vld [vmem:[#allocation7 + $0x7c] sm:$0xf]
    %v166 = vld [vmem:[#allocation7 + $0x80] sm:$0xf]
    %v167 = vld [vmem:[#allocation7 + $0x84] sm:$0xf]
    %v168 = vld [vmem:[#allocation7 + $0x88] sm:$0xf]
    %v169 = vld [vmem:[#allocation7 + $0x8c] sm:$0xf]
    %v170 = vld [vmem:[#allocation7 + $0x90] sm:$0xf]
    %v171 = vld [vmem:[#allocation7 + $0x94] sm:$0xf]
    %v172 = vld [vmem:[#allocation7 + $0x98] sm:$0xf]
    %v173 = vld [vmem:[#allocation7 + $0x9c] sm:$0xf]
    %v174 = vld [vmem:[#allocation7 + $0xa0] sm:$0xf]
    %v175 = vld [vmem:[#allocation7 + $0xa4] sm:$0xf]
    %v176 = vld [vmem:[#allocation7 + $0xa8] sm:$0xf]
    %v177 = vld [vmem:[#allocation7 + $0xac] sm:$0xf]
    %v178 = vld [vmem:[#allocation7 + $0xb0] sm:$0xf]
    %v179 = vld [vmem:[#allocation7 + $0xb4] sm:$0xf]
    %v180 = vld [vmem:[#allocation7 + $0xb8] sm:$0xf]
    %v181 = vld [vmem:[#allocation7 + $0xbc] sm:$0xf]
    %v182 = vld [vmem:[#allocation7 + $0xc0] sm:$0xf]
    %v183 = vld [vmem:[#allocation7 + $0xc4] sm:$0xf]
    %v184 = vld [vmem:[#allocation7 + $0xc8] sm:$0xf]
    %v185 = vld [vmem:[#allocation7 + $0xcc] sm:$0xf]
    %v186 = vld [vmem:[#allocation7 + $0xd0] sm:$0xf]
    %v187 = vld [vmem:[#allocation7 + $0xd4] sm:$0xf]
    %v188 = vld [vmem:[#allocation7 + $0xd8] sm:$0xf]
    %v189 = vld [vmem:[#allocation7 + $0xdc] sm:$0xf]
    %v190 = vld [vmem:[#allocation7 + $0xe0] sm:$0xf]
    %v191 = vld [vmem:[#allocation7 + $0xe4] sm:$0xf]
    %v192 = vld [vmem:[#allocation7 + $0xe8] sm:$0xf]
    %v193 = vld [vmem:[#allocation7 + $0xec] sm:$0xf]
    %v194 = vld [vmem:[#allocation7 + $0xf0] sm:$0xf]
    %v195 = vld [vmem:[#allocation7 + $0xf4] sm:$0xf]
    %v196 = vld [vmem:[#allocation7 + $0xf8] sm:$0xf]
    %v197 = vld [vmem:[#allocation7 + $0xfc] sm:$0xf]
    %v198 = vld [vmem:[#allocation7 + $0x100] sm:$0xf]
    %v199 = vld [vmem:[#allocation7 + $0x104] sm:$0xf]
    %v200 = vld [vmem:[#allocation7 + $0x108] sm:$0xf]
    %v201 = vld [vmem:[#allocation7 + $0x10c] sm:$0xf]
    %v202 = vld [vmem:[#allocation7 + $0x110] sm:$0xf]
    %v203 = vld [vmem:[#allocation7 + $0x114] sm:$0xf]
    %v204 = vld [vmem:[#allocation7 + $0x118] sm:$0xf]
    %v205 = vld [vmem:[#allocation7 + $0x11c] sm:$0xf]
    %v206 = vld [vmem:[#allocation7 + $0x120] sm:$0xf]
    %v207 = vld [vmem:[#allocation7 + $0x124] sm:$0xf]
    %v208 = vld [vmem:[#allocation7 + $0x128] sm:$0xf]
    %v209 = vld [vmem:[#allocation7 + $0x12c] sm:$0xf]
    %v210 = vld [vmem:[#allocation7 + $0x130] sm:$0xf]
    %v211 = vld [vmem:[#allocation7 + $0x134] sm:$0xf]
    %v212 = vld [vmem:[#allocation7 + $0x138] sm:$0xf]
    %v213 = vld [vmem:[#allocation7 + $0x13c] sm:$0xf]
    %v214 = vld [vmem:[#allocation7 + $0x140] sm:$0xf]
    %v215 = vld [vmem:[#allocation7 + $0x144] sm:$0xf]
    %v216 = vld [vmem:[#allocation7 + $0x148] sm:$0xf]
    %v217 = vld [vmem:[#allocation7 + $0x14c] sm:$0xf]
    %v218 = vld [vmem:[#allocation7 + $0x150] sm:$0xf]
    %v219 = vld [vmem:[#allocation7 + $0x154] sm:$0xf]
    %v220 = vld [vmem:[#allocation7 + $0x158] sm:$0xf]
    %v221 = vld [vmem:[#allocation7 + $0x15c] sm:$0xf]
    %v222 = vld [vmem:[#allocation7 + $0x160] sm:$0xf]
    %v223 = vld [vmem:[#allocation7 + $0x164] sm:$0xf]
    %v224 = vld [vmem:[#allocation7 + $0x168] sm:$0xf]
    %v225 = vld [vmem:[#allocation7 + $0x16c] sm:$0xf]
    %v226 = vld [vmem:[#allocation7 + $0x170] sm:$0xf]
    %v227 = vld [vmem:[#allocation7 + $0x174] sm:$0xf]
    %v228 = vld [vmem:[#allocation7 + $0x178] sm:$0xf]
    %v229 = vld [vmem:[#allocation7 + $0x17c] sm:$0xf]
    %v230 = vld [vmem:[#allocation7 + $0x180] sm:$0xf]
    %v231 = vld [vmem:[#allocation7 + $0x184] sm:$0xf]
    %v232 = vld [vmem:[#allocation7 + $0x188] sm:$0xf]
    %v233 = vld [vmem:[#allocation7 + $0x18c] sm:$0xf]
    %v234 = vld [vmem:[#allocation7 + $0x190] sm:$0xf]
    %v235 = vld [vmem:[#allocation7 + $0x194] sm:$0xf]
    %v236 = vld [vmem:[#allocation7 + $0x198] sm:$0xf]
    %v237 = vld [vmem:[#allocation7 + $0x19c] sm:$0xf]
    %v238 = vld [vmem:[#allocation7 + $0x1a0] sm:$0xf]
    %v239 = vld [vmem:[#allocation7 + $0x1a4] sm:$0xf]
    %v240 = vld [vmem:[#allocation7 + $0x1a8] sm:$0xf]
    %v241 = vld [vmem:[#allocation7 + $0x1ac] sm:$0xf]
    %v242 = vld [vmem:[#allocation7 + $0x1b0] sm:$0xf]
    %v243 = vld [vmem:[#allocation7 + $0x1b4] sm:$0xf]
    %v244 = vld [vmem:[#allocation7 + $0x1b8] sm:$0xf]
    %v245 = vld [vmem:[#allocation7 + $0x1bc] sm:$0xf]
    %v246 = vld [vmem:[#allocation7 + $0x1c0] sm:$0xf]
    %v247 = vld [vmem:[#allocation7 + $0x1c4] sm:$0xf]
    %v248 = vld [vmem:[#allocation7 + $0x1c8] sm:$0xf]
    %v249 = vld [vmem:[#allocation7 + $0x1cc] sm:$0xf]
    %v250 = vld [vmem:[#allocation7 + $0x1d0] sm:$0xf]
    %v251 = vld [vmem:[#allocation7 + $0x1d4] sm:$0xf]
    %v252 = vld [vmem:[#allocation7 + $0x1d8] sm:$0xf]
    %v253 = vld [vmem:[#allocation7 + $0x1dc] sm:$0xf]
    %v254 = vld [vmem:[#allocation7 + $0x1e0] sm:$0xf]
    %v255 = vld [vmem:[#allocation7 + $0x1e4] sm:$0xf]
    %v256 = vld [vmem:[#allocation7 + $0x1e8] sm:$0xf]
    %v257 = vld [vmem:[#allocation7 + $0x1ec] sm:$0xf]
    %v258 = vld [vmem:[#allocation7 + $0x1f0] sm:$0xf]
    %v259 = vld [vmem:[#allocation7 + $0x1f4] sm:$0xf]
    %v260 = vld [vmem:[#allocation7 + $0x1f8] sm:$0xf]
    %v261 = vld [vmem:[#allocation7 + $0x1fc] sm:$0xf]
    %v262 = vld [vmem:[%s3] sm:$0x1]
    %v264 = vlaneseq
    %v265 = vshrl.u32 %v264, 7
    %v266 = vsub.s32 0, %v265
    %v267 = vrot.slane %v262, %v266
    %v397 = vunpack.c.l.b16 %v134
    %v398 = vunpack.c.l.b16 %v135
    %v399 = vunpack.c.l.b16 %v136
    %v400 = vunpack.c.l.b16 %v137
    %v401 = vunpack.c.l.b16 %v138
    %v402 = vunpack.c.l.b16 %v139
    %v403 = vunpack.c.l.b16 %v140
    %v404 = vunpack.c.l.b16 %v141
    %v405 = vunpack.c.l.b16 %v142
    %v406 = vunpack.c.l.b16 %v143
    %v407 = vunpack.c.l.b16 %v144
    %v408 = vunpack.c.l.b16 %v145
    %v409 = vunpack.c.l.b16 %v146
    %v410 = vunpack.c.l.b16 %v147
    %v411 = vunpack.c.l.b16 %v148
    %v412 = vunpack.c.l.b16 %v149
    %v413 = vunpack.c.l.b16 %v150
    %v414 = vunpack.c.l.b16 %v151
    %v415 = vunpack.c.l.b16 %v152
    %v416 = vunpack.c.l.b16 %v153
    %v417 = vunpack.c.l.b16 %v154
    %v418 = vunpack.c.l.b16 %v155
    %v419 = vunpack.c.l.b16 %v156
    %v420 = vunpack.c.l.b16 %v157
    %v421 = vunpack.c.l.b16 %v158
    %v422 = vunpack.c.l.b16 %v159
    %v423 = vunpack.c.l.b16 %v160
    %v424 = vunpack.c.l.b16 %v161
    %v425 = vunpack.c.l.b16 %v162
    %v426 = vunpack.c.l.b16 %v163
    %v427 = vunpack.c.l.b16 %v164
    %v428 = vunpack.c.l.b16 %v165
    %v429 = vunpack.c.l.b16 %v166
    %v430 = vunpack.c.l.b16 %v167
    %v431 = vunpack.c.l.b16 %v168
    %v432 = vunpack.c.l.b16 %v169
    %v433 = vunpack.c.l.b16 %v170
    %v434 = vunpack.c.l.b16 %v171
    %v435 = vunpack.c.l.b16 %v172
    %v436 = vunpack.c.l.b16 %v173
    %v437 = vunpack.c.l.b16 %v174
    %v438 = vunpack.c.l.b16 %v175
    %v439 = vunpack.c.l.b16 %v176
    %v440 = vunpack.c.l.b16 %v177
    %v441 = vunpack.c.l.b16 %v178
    %v442 = vunpack.c.l.b16 %v179
    %v443 = vunpack.c.l.b16 %v180
    %v444 = vunpack.c.l.b16 %v181
    %v445 = vunpack.c.l.b16 %v182
    %v446 = vunpack.c.l.b16 %v183
    %v447 = vunpack.c.l.b16 %v184
    %v448 = vunpack.c.l.b16 %v185
    %v449 = vunpack.c.l.b16 %v186
    %v450 = vunpack.c.l.b16 %v187
    %v451 = vunpack.c.l.b16 %v188
    %v452 = vunpack.c.l.b16 %v189
    %v453 = vunpack.c.l.b16 %v190
    %v454 = vunpack.c.l.b16 %v191
    %v455 = vunpack.c.l.b16 %v192
    %v456 = vunpack.c.l.b16 %v193
    %v457 = vunpack.c.l.b16 %v194
    %v458 = vunpack.c.l.b16 %v195
    %v459 = vunpack.c.l.b16 %v196
    %v460 = vunpack.c.l.b16 %v197
    %v461 = vunpack.c.l.b16 %v198
    %v462 = vunpack.c.l.b16 %v199
    %v463 = vunpack.c.l.b16 %v200
    %v464 = vunpack.c.l.b16 %v201
    %v465 = vunpack.c.l.b16 %v202
    %v466 = vunpack.c.l.b16 %v203
    %v467 = vunpack.c.l.b16 %v204
    %v468 = vunpack.c.l.b16 %v205
    %v469 = vunpack.c.l.b16 %v206
    %v470 = vunpack.c.l.b16 %v207
    %v471 = vunpack.c.l.b16 %v208
    %v472 = vunpack.c.l.b16 %v209
    %v473 = vunpack.c.l.b16 %v210
    %v474 = vunpack.c.l.b16 %v211
    %v475 = vunpack.c.l.b16 %v212
    %v476 = vunpack.c.l.b16 %v213
    %v477 = vunpack.c.l.b16 %v214
    %v478 = vunpack.c.l.b16 %v215
    %v479 = vunpack.c.l.b16 %v216
    %v480 = vunpack.c.l.b16 %v217
    %v481 = vunpack.c.l.b16 %v218
    %v482 = vunpack.c.l.b16 %v219
    %v483 = vunpack.c.l.b16 %v220
    %v484 = vunpack.c.l.b16 %v221
    %v485 = vunpack.c.l.b16 %v222
    %v486 = vunpack.c.l.b16 %v223
    %v487 = vunpack.c.l.b16 %v224
    %v488 = vunpack.c.l.b16 %v225
    %v489 = vunpack.c.l.b16 %v226
    %v490 = vunpack.c.l.b16 %v227
    %v491 = vunpack.c.l.b16 %v228
    %v492 = vunpack.c.l.b16 %v229
    %v493 = vunpack.c.l.b16 %v230
    %v494 = vunpack.c.l.b16 %v231
    %v495 = vunpack.c.l.b16 %v232
    %v496 = vunpack.c.l.b16 %v233
    %v497 = vunpack.c.l.b16 %v234
    %v498 = vunpack.c.l.b16 %v235
    %v499 = vunpack.c.l.b16 %v236
    %v500 = vunpack.c.l.b16 %v237
    %v501 = vunpack.c.l.b16 %v238
    %v502 = vunpack.c.l.b16 %v239
    %v503 = vunpack.c.l.b16 %v240
    %v504 = vunpack.c.l.b16 %v241
    %v505 = vunpack.c.l.b16 %v242
    %v506 = vunpack.c.l.b16 %v243
    %v507 = vunpack.c.l.b16 %v244
    %v508 = vunpack.c.l.b16 %v245
    %v509 = vunpack.c.l.b16 %v246
    %v510 = vunpack.c.l.b16 %v247
    %v511 = vunpack.c.l.b16 %v248
    %v512 = vunpack.c.l.b16 %v249
    %v513 = vunpack.c.l.b16 %v250
    %v514 = vunpack.c.l.b16 %v251
    %v515 = vunpack.c.l.b16 %v252
    %v516 = vunpack.c.l.b16 %v253
    %v517 = vunpack.c.l.b16 %v254
    %v518 = vunpack.c.l.b16 %v255
    %v519 = vunpack.c.l.b16 %v256
    %v520 = vunpack.c.l.b16 %v257
    %v521 = vunpack.c.l.b16 %v258
    %v522 = vunpack.c.l.b16 %v259
    %v523 = vunpack.c.l.b16 %v260
    %v524 = vunpack.c.l.b16 %v261
    %v525 = vpack.c.b16 %v398, %v397
    %v526 = vpack.c.b16 %v400, %v399
    %v527 = vpack.c.b16 %v402, %v401
    %v528 = vpack.c.b16 %v404, %v403
    %v529 = vpack.c.b16 %v406, %v405
    %v530 = vpack.c.b16 %v408, %v407
    %v531 = vpack.c.b16 %v410, %v409
    %v532 = vpack.c.b16 %v412, %v411
    %v533 = vpack.c.b16 %v414, %v413
    %v534 = vpack.c.b16 %v416, %v415
    %v535 = vpack.c.b16 %v418, %v417
    %v536 = vpack.c.b16 %v420, %v419
    %v537 = vpack.c.b16 %v422, %v421
    %v538 = vpack.c.b16 %v424, %v423
    %v539 = vpack.c.b16 %v426, %v425
    %v540 = vpack.c.b16 %v428, %v427
    %v541 = vpack.c.b16 %v430, %v429
    %v542 = vpack.c.b16 %v432, %v431
    %v543 = vpack.c.b16 %v434, %v433
    %v544 = vpack.c.b16 %v436, %v435
    %v545 = vpack.c.b16 %v438, %v437
    %v546 = vpack.c.b16 %v440, %v439
    %v547 = vpack.c.b16 %v442, %v441
    %v548 = vpack.c.b16 %v444, %v443
    %v549 = vpack.c.b16 %v446, %v445
    %v550 = vpack.c.b16 %v448, %v447
    %v551 = vpack.c.b16 %v450, %v449
    %v552 = vpack.c.b16 %v452, %v451
    %v553 = vpack.c.b16 %v454, %v453
    %v554 = vpack.c.b16 %v456, %v455
    %v555 = vpack.c.b16 %v458, %v457
    %v556 = vpack.c.b16 %v460, %v459
    %v557 = vpack.c.b16 %v462, %v461
    %v558 = vpack.c.b16 %v464, %v463
    %v559 = vpack.c.b16 %v466, %v465
    %v560 = vpack.c.b16 %v468, %v467
    %v561 = vpack.c.b16 %v470, %v469
    %v562 = vpack.c.b16 %v472, %v471
    %v563 = vpack.c.b16 %v474, %v473
    %v564 = vpack.c.b16 %v476, %v475
    %v565 = vpack.c.b16 %v478, %v477
    %v566 = vpack.c.b16 %v480, %v479
    %v567 = vpack.c.b16 %v482, %v481
    %v568 = vpack.c.b16 %v484, %v483
    %v569 = vpack.c.b16 %v486, %v485
    %v570 = vpack.c.b16 %v488, %v487
    %v571 = vpack.c.b16 %v490, %v489
    %v572 = vpack.c.b16 %v492, %v491
    %v573 = vpack.c.b16 %v494, %v493
    %v574 = vpack.c.b16 %v496, %v495
    %v575 = vpack.c.b16 %v498, %v497
    %v576 = vpack.c.b16 %v500, %v499
    %v577 = vpack.c.b16 %v502, %v501
    %v578 = vpack.c.b16 %v504, %v503
    %v579 = vpack.c.b16 %v506, %v505
    %v580 = vpack.c.b16 %v508, %v507
    %v581 = vpack.c.b16 %v510, %v509
    %v582 = vpack.c.b16 %v512, %v511
    %v583 = vpack.c.b16 %v514, %v513
    %v584 = vpack.c.b16 %v516, %v515
    %v585 = vpack.c.b16 %v518, %v517
    %v586 = vpack.c.b16 %v520, %v519
    %v587 = vpack.c.b16 %v522, %v521
    %v588 = vpack.c.b16 %v524, %v523
    %653 = vmatprep.subr.bf16.mxu0 0
    %654 = vmatpush1.bf16.msra.mxu0 %v532
    %655 = vmatprep.subr.bf16.mxu0 0
    %656 = vmatpush1.bf16.msra.mxu0 %v531
    %657 = vmatprep.subr.bf16.mxu0 0
    %658 = vmatpush1.bf16.msra.mxu0 %v530
    %659 = vmatprep.subr.bf16.mxu0 0
    %660 = vmatpush1.bf16.msra.mxu0 %v529
    %661 = vmatprep.subr.bf16.mxu0 0
    %662 = vmatpush1.bf16.msra.mxu0 %v528
    %663 = vmatprep.subr.bf16.mxu0 0
    %664 = vmatpush1.bf16.msra.mxu0 %v527
    %665 = vmatprep.subr.bf16.mxu0 0
    %666 = vmatpush1.bf16.msra.mxu0 %v526
    %667 = vmatprep.subr.bf16.mxu0 0
    %668 = vmatpush1.bf16.msra.mxu0 %v525
    %669 = vmatprep.subr.bf16.mxu0 0
    %670 = vmatpush2.bf16.msra.mxu0 %v540
    %671 = vmatprep.subr.bf16.mxu0 0
    %672 = vmatpush2.bf16.msra.mxu0 %v539
    %673 = vmatprep.subr.bf16.mxu0 0
    %674 = vmatpush2.bf16.msra.mxu0 %v538
    %675 = vmatprep.subr.bf16.mxu0 0
    %676 = vmatpush2.bf16.msra.mxu0 %v537
    %677 = vmatprep.subr.bf16.mxu0 0
    %678 = vmatpush2.bf16.msra.mxu0 %v536
    %679 = vmatprep.subr.bf16.mxu0 0
    %680 = vmatpush2.bf16.msra.mxu0 %v535
    %681 = vmatprep.subr.bf16.mxu0 0
    %682 = vmatpush2.bf16.msra.mxu0 %v534
    %683 = vmatprep.subr.bf16.mxu0 0
    %684 = vmatpush2.bf16.msra.mxu0 %v533
    %685 = vmatprep.mubr.bf16.mxu0 %v127
    %686 = vmatmul.mubr.bf16.gmra.mxu0 %v126
    %v687 = vpop.f32.mrf.mxu0
    %v688 = vadd.f32 %v267, %v687
    %v689 = vpop.f32.mrf.mxu0
    %v690 = vpop.f32.mrf.mxu0
    %v691 = vpop.f32.mrf.mxu0
    %692 = vdwg.mxu0
    %693 = vmatprep.subr.bf16.mxu0 0
    %694 = vmatpush1.bf16.msra.mxu0 %v548
    %695 = vmatprep.subr.bf16.mxu0 0
    %696 = vmatpush1.bf16.msra.mxu0 %v547
    %697 = vmatprep.subr.bf16.mxu0 0
    %698 = vmatpush1.bf16.msra.mxu0 %v546
    %699 = vmatprep.subr.bf16.mxu0 0
    %700 = vmatpush1.bf16.msra.mxu0 %v545
    %701 = vmatprep.subr.bf16.mxu0 0
    %702 = vmatpush1.bf16.msra.mxu0 %v544
    %703 = vmatprep.subr.bf16.mxu0 0
    %704 = vmatpush1.bf16.msra.mxu0 %v543
    %705 = vmatprep.subr.bf16.mxu0 0
    %706 = vmatpush1.bf16.msra.mxu0 %v542
    %707 = vmatprep.subr.bf16.mxu0 0
    %708 = vmatpush1.bf16.msra.mxu0 %v541
    %709 = vmatprep.subr.bf16.mxu0 0
    %710 = vmatpush2.bf16.msra.mxu0 %v556
    %711 = vmatprep.subr.bf16.mxu0 0
    %712 = vmatpush2.bf16.msra.mxu0 %v555
    %713 = vmatprep.subr.bf16.mxu0 0
    %714 = vmatpush2.bf16.msra.mxu0 %v554
    %715 = vmatprep.subr.bf16.mxu0 0
    %716 = vmatpush2.bf16.msra.mxu0 %v553
    %717 = vmatprep.subr.bf16.mxu0 0
    %718 = vmatpush2.bf16.msra.mxu0 %v552
    %719 = vmatprep.subr.bf16.mxu0 0
    %720 = vmatpush2.bf16.msra.mxu0 %v551
    %721 = vmatprep.subr.bf16.mxu0 0
    %722 = vmatpush2.bf16.msra.mxu0 %v550
    %723 = vmatprep.subr.bf16.mxu0 0
    %724 = vmatpush2.bf16.msra.mxu0 %v549
    %725 = vmatprep.mubr.bf16.mxu0 %v129
    %726 = vmatmul.mubr.bf16.gmra.mxu0 %v128
    %v727 = vpop.f32.mrf.mxu0
    %v728 = vadd.f32 %v688, %v727
    %v729 = vpop.f32.mrf.mxu0
    %v730 = vpop.f32.mrf.mxu0
    %v731 = vpop.f32.mrf.mxu0
    %732 = vdwg.mxu0
    %733 = vmatprep.subr.bf16.mxu0 0
    %734 = vmatpush1.bf16.msra.mxu0 %v564
    %735 = vmatprep.subr.bf16.mxu0 0
    %736 = vmatpush1.bf16.msra.mxu0 %v563
    %737 = vmatprep.subr.bf16.mxu0 0
    %738 = vmatpush1.bf16.msra.mxu0 %v562
    %739 = vmatprep.subr.bf16.mxu0 0
    %740 = vmatpush1.bf16.msra.mxu0 %v561
    %741 = vmatprep.subr.bf16.mxu0 0
    %742 = vmatpush1.bf16.msra.mxu0 %v560
    %743 = vmatprep.subr.bf16.mxu0 0
    %744 = vmatpush1.bf16.msra.mxu0 %v559
    %745 = vmatprep.subr.bf16.mxu0 0
    %746 = vmatpush1.bf16.msra.mxu0 %v558
    %747 = vmatprep.subr.bf16.mxu0 0
    %748 = vmatpush1.bf16.msra.mxu0 %v557
    %749 = vmatprep.subr.bf16.mxu0 0
    %750 = vmatpush2.bf16.msra.mxu0 %v572
    %751 = vmatprep.subr.bf16.mxu0 0
    %752 = vmatpush2.bf16.msra.mxu0 %v571
    %753 = vmatprep.subr.bf16.mxu0 0
    %754 = vmatpush2.bf16.msra.mxu0 %v570
    %755 = vmatprep.subr.bf16.mxu0 0
    %756 = vmatpush2.bf16.msra.mxu0 %v569
    %757 = vmatprep.subr.bf16.mxu0 0
    %758 = vmatpush2.bf16.msra.mxu0 %v568
    %759 = vmatprep.subr.bf16.mxu0 0
    %760 = vmatpush2.bf16.msra.mxu0 %v567
    %761 = vmatprep.subr.bf16.mxu0 0
    %762 = vmatpush2.bf16.msra.mxu0 %v566
    %763 = vmatprep.subr.bf16.mxu0 0
    %764 = vmatpush2.bf16.msra.mxu0 %v565
    %765 = vmatprep.mubr.bf16.mxu0 %v131
    %766 = vmatmul.mubr.bf16.gmra.mxu0 %v130
    %v767 = vpop.f32.mrf.mxu0
    %v768 = vadd.f32 %v728, %v767
    %v769 = vpop.f32.mrf.mxu0
    %v770 = vpop.f32.mrf.mxu0
    %v771 = vpop.f32.mrf.mxu0
    %772 = vdwg.mxu0
    %773 = vmatprep.subr.bf16.mxu0 0
    %774 = vmatpush1.bf16.msra.mxu0 %v580
    %775 = vmatprep.subr.bf16.mxu0 0
    %776 = vmatpush1.bf16.msra.mxu0 %v579
    %777 = vmatprep.subr.bf16.mxu0 0
    %778 = vmatpush1.bf16.msra.mxu0 %v578
    %779 = vmatprep.subr.bf16.mxu0 0
    %780 = vmatpush1.bf16.msra.mxu0 %v577
    %781 = vmatprep.subr.bf16.mxu0 0
    %782 = vmatpush1.bf16.msra.mxu0 %v576
    %783 = vmatprep.subr.bf16.mxu0 0
    %784 = vmatpush1.bf16.msra.mxu0 %v575
    %785 = vmatprep.subr.bf16.mxu0 0
    %786 = vmatpush1.bf16.msra.mxu0 %v574
    %787 = vmatprep.subr.bf16.mxu0 0
    %788 = vmatpush1.bf16.msra.mxu0 %v573
    %789 = vmatprep.subr.bf16.mxu0 0
    %790 = vmatpush2.bf16.msra.mxu0 %v588
    %791 = vmatprep.subr.bf16.mxu0 0
    %792 = vmatpush2.bf16.msra.mxu0 %v587
    %793 = vmatprep.subr.bf16.mxu0 0
    %794 = vmatpush2.bf16.msra.mxu0 %v586
    %795 = vmatprep.subr.bf16.mxu0 0
    %796 = vmatpush2.bf16.msra.mxu0 %v585
    %797 = vmatprep.subr.bf16.mxu0 0
    %798 = vmatpush2.bf16.msra.mxu0 %v584
    %799 = vmatprep.subr.bf16.mxu0 0
    %800 = vmatpush2.bf16.msra.mxu0 %v583
    %801 = vmatprep.subr.bf16.mxu0 0
    %802 = vmatpush2.bf16.msra.mxu0 %v582
    %803 = vmatprep.subr.bf16.mxu0 0
    %804 = vmatpush2.bf16.msra.mxu0 %v581
    %805 = vmatprep.mubr.bf16.mxu0 %v133
    %806 = vmatmul.mubr.bf16.gmra.mxu0 %v132
    %v807 = vpop.f32.mrf.mxu0
    %v808 = vadd.f32 %v768, %v807
    %v809 = vpop.f32.mrf.mxu0
    %v810 = vpop.f32.mrf.mxu0
    %v811 = vpop.f32.mrf.mxu0
    %812 = vdwg.mxu0
    %v813 = vmax.f32 %v808, 0.0
    %v814 = vpack.c.bf16 %v813, %v813
    %v815 = vld [vmem:[#allocation8] sm:$0xff]
    %v816 = vld [vmem:[#allocation8 + $0x8] sm:$0xff]
    %v817 = vld [vmem:[#allocation8 + $0x10] sm:$0xff]
    %v818 = vld [vmem:[#allocation8 + $0x18] sm:$0xff]
    %v819 = vld [vmem:[#allocation8 + $0x20] sm:$0xff]
    %v820 = vld [vmem:[#allocation8 + $0x28] sm:$0xff]
    %v821 = vld [vmem:[#allocation8 + $0x30] sm:$0xff]
    %v822 = vld [vmem:[#allocation8 + $0x38] sm:$0xff]
    %v823 = vld [vmem:[#allocation8 + $0x40] sm:$0xff]
    %v824 = vld [vmem:[#allocation8 + $0x48] sm:$0xff]
    %v825 = vld [vmem:[#allocation8 + $0x50] sm:$0xff]
    %v826 = vld [vmem:[#allocation8 + $0x58] sm:$0xff]
    %v827 = vld [vmem:[#allocation8 + $0x60] sm:$0xff]
    %v828 = vld [vmem:[#allocation8 + $0x68] sm:$0xff]
    %v829 = vld [vmem:[#allocation8 + $0x70] sm:$0xff]
    %v830 = vld [vmem:[#allocation8 + $0x78] sm:$0xff]
    %v831 = vld [vmem:[%s5] sm:$0x3]
    %v833 = vlaneseq
    %v834 = vshrl.u32 %v833, 7
    %v835 = vsub.s32 0, %v834
    %v836 = vrot.slane %v831, %v835
    %v837 = vlaneseq
    %v838 = vshrl.u32 %v837, 7
    %v839 = vsub.s32 1, %v838
    %v840 = vrot.slane %v831, %v839
    %v859 = vunpack.c.l.b16 %v815
    %v860 = vunpack.c.h.b16 %v815
    %v861 = vunpack.c.l.b16 %v816
    %v862 = vunpack.c.h.b16 %v816
    %v863 = vunpack.c.l.b16 %v817
    %v864 = vunpack.c.h.b16 %v817
    %v865 = vunpack.c.l.b16 %v818
    %v866 = vunpack.c.h.b16 %v818
    %v867 = vunpack.c.l.b16 %v819
    %v868 = vunpack.c.h.b16 %v819
    %v869 = vunpack.c.l.b16 %v820
    %v870 = vunpack.c.h.b16 %v820
    %v871 = vunpack.c.l.b16 %v821
    %v872 = vunpack.c.h.b16 %v821
    %v873 = vunpack.c.l.b16 %v822
    %v874 = vunpack.c.h.b16 %v822
    %v875 = vunpack.c.l.b16 %v823
    %v876 = vunpack.c.h.b16 %v823
    %v877 = vunpack.c.l.b16 %v824
    %v878 = vunpack.c.h.b16 %v824
    %v879 = vunpack.c.l.b16 %v825
    %v880 = vunpack.c.h.b16 %v825
    %v881 = vunpack.c.l.b16 %v826
    %v882 = vunpack.c.h.b16 %v826
    %v883 = vunpack.c.l.b16 %v827
    %v884 = vunpack.c.h.b16 %v827
    %v885 = vunpack.c.l.b16 %v828
    %v886 = vunpack.c.h.b16 %v828
    %v887 = vunpack.c.l.b16 %v829
    %v888 = vunpack.c.h.b16 %v829
    %v889 = vunpack.c.l.b16 %v830
    %v890 = vunpack.c.h.b16 %v830
    %v891 = vpack.c.b16 %v861, %v859
    %v892 = vpack.c.b16 %v862, %v860
    %v893 = vpack.c.b16 %v865, %v863
    %v894 = vpack.c.b16 %v866, %v864
    %v895 = vpack.c.b16 %v869, %v867
    %v896 = vpack.c.b16 %v870, %v868
    %v897 = vpack.c.b16 %v873, %v871
    %v898 = vpack.c.b16 %v874, %v872
    %v899 = vpack.c.b16 %v877, %v875
    %v900 = vpack.c.b16 %v878, %v876
    %v901 = vpack.c.b16 %v881, %v879
    %v902 = vpack.c.b16 %v882, %v880
    %v903 = vpack.c.b16 %v885, %v883
    %v904 = vpack.c.b16 %v886, %v884
    %v905 = vpack.c.b16 %v889, %v887
    %v906 = vpack.c.b16 %v890, %v888
    %923 = vmatprep.subr.bf16.mxu0 %v906
    %924 = vmatpush1.bf16.msra.mxu0 %v905
    %925 = vmatprep.subr.bf16.mxu0 %v904
    %926 = vmatpush1.bf16.msra.mxu0 %v903
    %927 = vmatprep.subr.bf16.mxu0 %v902
    %928 = vmatpush1.bf16.msra.mxu0 %v901
    %929 = vmatprep.subr.bf16.mxu0 %v900
    %930 = vmatpush1.bf16.msra.mxu0 %v899
    %931 = vmatprep.subr.bf16.mxu0 %v898
    %932 = vmatpush1.bf16.msra.mxu0 %v897
    %933 = vmatprep.subr.bf16.mxu0 %v896
    %934 = vmatpush1.bf16.msra.mxu0 %v895
    %935 = vmatprep.subr.bf16.mxu0 %v894
    %936 = vmatpush1.bf16.msra.mxu0 %v893
    %937 = vmatprep.subr.bf16.mxu0 %v892
    %938 = vmatpush1.bf16.msra.mxu0 %v891
    %939 = vmatprep.subr.bf16.mxu0 0
    %940 = vmatpush2.bf16.msra.mxu0 0
    %941 = vmatprep.subr.bf16.mxu0 0
    %942 = vmatpush2.bf16.msra.mxu0 0
    %943 = vmatprep.subr.bf16.mxu0 0
    %944 = vmatpush2.bf16.msra.mxu0 0
    %945 = vmatprep.subr.bf16.mxu0 0
    %946 = vmatpush2.bf16.msra.mxu0 0
    %947 = vmatprep.subr.bf16.mxu0 0
    %948 = vmatpush2.bf16.msra.mxu0 0
    %949 = vmatprep.subr.bf16.mxu0 0
    %950 = vmatpush2.bf16.msra.mxu0 0
    %951 = vmatprep.subr.bf16.mxu0 0
    %952 = vmatpush2.bf16.msra.mxu0 0
    %953 = vmatprep.subr.bf16.mxu0 0
    %954 = vmatpush2.bf16.msra.mxu0 0
    %955 = vmatprep.mubr.bf16.mxu0 0
    %956 = vmatmul.mubr.bf16.gmra.mxu0 %v814
    %v957 = vpop.f32.mrf.mxu0
    %v958 = vadd.f32 %v836, %v957
    %v959 = vpop.f32.mrf.mxu0
    %v960 = vadd.f32 %v840, %v959
    %v961 = vpop.f32.mrf.mxu0
    %v962 = vpop.f32.mrf.mxu0
    %963 = vdwg.mxu0
    %v964 = vmul.f32 %v960, 0.5
    %v965 = vmul.f32 %v964, 1.442695
    %v966 = vpow.pop %v965
    %v967 = vld [vmem:[#allocation5] sm:$0xff]
    %v968 = vmul.f32 %v966, %v967
    %v969 = vadd.f32 %v958, %v968
    %v970 = vpack.c.bf16 %v969, %v969
    %v971 = vld [vmem:[#allocation10] sm:$0xf]
    %v972 = vld [vmem:[#allocation10 + $0x4] sm:$0xf]
    %v973 = vld [vmem:[#allocation10 + $0x8] sm:$0xf]
    %v974 = vld [vmem:[#allocation10 + $0xc] sm:$0xf]
    %v975 = vld [vmem:[#allocation10 + $0x10] sm:$0xf]
    %v976 = vld [vmem:[#allocation10 + $0x14] sm:$0xf]
    %v977 = vld [vmem:[#allocation10 + $0x18] sm:$0xf]
    %v978 = vld [vmem:[#allocation10 + $0x1c] sm:$0xf]
    %v979 = vld [vmem:[#allocation10 + $0x20] sm:$0xf]
    %v980 = vld [vmem:[#allocation10 + $0x24] sm:$0xf]
    %v981 = vld [vmem:[#allocation10 + $0x28] sm:$0xf]
    %v982 = vld [vmem:[#allocation10 + $0x2c] sm:$0xf]
    %v983 = vld [vmem:[#allocation10 + $0x30] sm:$0xf]
    %v984 = vld [vmem:[#allocation10 + $0x34] sm:$0xf]
    %v985 = vld [vmem:[#allocation10 + $0x38] sm:$0xf]
    %v986 = vld [vmem:[#allocation10 + $0x3c] sm:$0xf]
    %v987 = vld [vmem:[%s7] sm:$0x1]
    %v989 = vlaneseq
    %v990 = vshrl.u32 %v989, 7
    %v991 = vsub.s32 0, %v990
    %v992 = vrot.slane %v987, %v991
    %v1010 = vunpack.c.l.b16 %v971
    %v1011 = vunpack.c.l.b16 %v972
    %v1012 = vunpack.c.l.b16 %v973
    %v1013 = vunpack.c.l.b16 %v974
    %v1014 = vunpack.c.l.b16 %v975
    %v1015 = vunpack.c.l.b16 %v976
    %v1016 = vunpack.c.l.b16 %v977
    %v1017 = vunpack.c.l.b16 %v978
    %v1018 = vunpack.c.l.b16 %v979
    %v1019 = vunpack.c.l.b16 %v980
    %v1020 = vunpack.c.l.b16 %v981
    %v1021 = vunpack.c.l.b16 %v982
    %v1022 = vunpack.c.l.b16 %v983
    %v1023 = vunpack.c.l.b16 %v984
    %v1024 = vunpack.c.l.b16 %v985
    %v1025 = vunpack.c.l.b16 %v986
    %v1026 = vpack.c.b16 %v1011, %v1010
    %v1027 = vpack.c.b16 %v1013, %v1012
    %v1028 = vpack.c.b16 %v1015, %v1014
    %v1029 = vpack.c.b16 %v1017, %v1016
    %v1030 = vpack.c.b16 %v1019, %v1018
    %v1031 = vpack.c.b16 %v1021, %v1020
    %v1032 = vpack.c.b16 %v1023, %v1022
    %v1033 = vpack.c.b16 %v1025, %v1024
    %1042 = vmatprep.subr.bf16.mxu0 0
    %1043 = vmatpush1.bf16.msra.mxu0 %v1033
    %1044 = vmatprep.subr.bf16.mxu0 0
    %1045 = vmatpush1.bf16.msra.mxu0 %v1032
    %1046 = vmatprep.subr.bf16.mxu0 0
    %1047 = vmatpush1.bf16.msra.mxu0 %v1031
    %1048 = vmatprep.subr.bf16.mxu0 0
    %1049 = vmatpush1.bf16.msra.mxu0 %v1030
    %1050 = vmatprep.subr.bf16.mxu0 0
    %1051 = vmatpush1.bf16.msra.mxu0 %v1029
    %1052 = vmatprep.subr.bf16.mxu0 0
    %1053 = vmatpush1.bf16.msra.mxu0 %v1028
    %1054 = vmatprep.subr.bf16.mxu0 0
    %1055 = vmatpush1.bf16.msra.mxu0 %v1027
    %1056 = vmatprep.subr.bf16.mxu0 0
    %1057 = vmatpush1.bf16.msra.mxu0 %v1026
    %1058 = vmatprep.subr.bf16.mxu0 0
    %1059 = vmatpush2.bf16.msra.mxu0 0
    %1060 = vmatprep.subr.bf16.mxu0 0
    %1061 = vmatpush2.bf16.msra.mxu0 0
    %1062 = vmatprep.subr.bf16.mxu0 0
    %1063 = vmatpush2.bf16.msra.mxu0 0
    %1064 = vmatprep.subr.bf16.mxu0 0
    %1065 = vmatpush2.bf16.msra.mxu0 0
    %1066 = vmatprep.subr.bf16.mxu0 0
    %1067 = vmatpush2.bf16.msra.mxu0 0
    %1068 = vmatprep.subr.bf16.mxu0 0
    %1069 = vmatpush2.bf16.msra.mxu0 0
    %1070 = vmatprep.subr.bf16.mxu0 0
    %1071 = vmatpush2.bf16.msra.mxu0 0
    %1072 = vmatprep.subr.bf16.mxu0 0
    %1073 = vmatpush2.bf16.msra.mxu0 0
    %1074 = vmatprep.mubr.bf16.mxu0 0
    %1075 = vmatmul.mubr.bf16.gmra.mxu0 %v970
    %v1076 = vpop.f32.mrf.mxu0
    %v1077 = vadd.f32 %v992, %v1076
    %v1078 = vpop.f32.mrf.mxu0
    %v1079 = vpop.f32.mrf.mxu0
    %v1080 = vpop.f32.mrf.mxu0
    %1081 = vdwg.mxu0
    %v1082 = vmax.f32 %v1077, 0.0
    %v1083 = vpack.c.bf16 %v1082, %v1082
    %v1084 = vld [vmem:[#allocation11] sm:$0xff]
    %v1085 = vld [vmem:[#allocation11 + $0x8] sm:$0xff]
    %v1086 = vld [vmem:[#allocation11 + $0x10] sm:$0xff]
    %v1087 = vld [vmem:[#allocation11 + $0x18] sm:$0xff]
    %v1088 = vld [vmem:[#allocation11 + $0x20] sm:$0xff]
    %v1089 = vld [vmem:[#allocation11 + $0x28] sm:$0xff]
    %v1090 = vld [vmem:[#allocation11 + $0x30] sm:$0xff]
    %v1091 = vld [vmem:[#allocation11 + $0x38] sm:$0xff]
    %v1092 = vld [vmem:[#allocation11 + $0x40] sm:$0xff]
    %v1093 = vld [vmem:[#allocation11 + $0x48] sm:$0xff]
    %v1094 = vld [vmem:[#allocation11 + $0x50] sm:$0xff]
    %v1095 = vld [vmem:[#allocation11 + $0x58] sm:$0xff]
    %v1096 = vld [vmem:[#allocation11 + $0x60] sm:$0xff]
    %v1097 = vld [vmem:[#allocation11 + $0x68] sm:$0xff]
    %v1098 = vld [vmem:[#allocation11 + $0x70] sm:$0xff]
    %v1099 = vld [vmem:[#allocation11 + $0x78] sm:$0xff]
    %v1100 = vld [vmem:[#allocation11 + $0x80] sm:$0xff]
    %v1101 = vld [vmem:[#allocation11 + $0x88] sm:$0xff]
    %v1102 = vld [vmem:[#allocation11 + $0x90] sm:$0xff]
    %v1103 = vld [vmem:[#allocation11 + $0x98] sm:$0xff]
    %v1104 = vld [vmem:[#allocation11 + $0xa0] sm:$0xff]
    %v1105 = vld [vmem:[#allocation11 + $0xa8] sm:$0xff]
    %v1106 = vld [vmem:[#allocation11 + $0xb0] sm:$0xff]
    %v1107 = vld [vmem:[#allocation11 + $0xb8] sm:$0xff]
    %v1108 = vld [vmem:[#allocation11 + $0xc0] sm:$0xff]
    %v1109 = vld [vmem:[#allocation11 + $0xc8] sm:$0xff]
    %v1110 = vld [vmem:[#allocation11 + $0xd0] sm:$0xff]
    %v1111 = vld [vmem:[#allocation11 + $0xd8] sm:$0xff]
    %v1112 = vld [vmem:[#allocation11 + $0xe0] sm:$0xff]
    %v1113 = vld [vmem:[#allocation11 + $0xe8] sm:$0xff]
    %v1114 = vld [vmem:[#allocation11 + $0xf0] sm:$0xff]
    %v1115 = vld [vmem:[#allocation11 + $0xf8] sm:$0xff]
    %v1116 = vld [vmem:[#allocation11 + $0x100] sm:$0xff]
    %v1117 = vld [vmem:[#allocation11 + $0x108] sm:$0xff]
    %v1118 = vld [vmem:[#allocation11 + $0x110] sm:$0xff]
    %v1119 = vld [vmem:[#allocation11 + $0x118] sm:$0xff]
    %v1120 = vld [vmem:[#allocation11 + $0x120] sm:$0xff]
    %v1121 = vld [vmem:[#allocation11 + $0x128] sm:$0xff]
    %v1122 = vld [vmem:[#allocation11 + $0x130] sm:$0xff]
    %v1123 = vld [vmem:[#allocation11 + $0x138] sm:$0xff]
    %v1124 = vld [vmem:[#allocation11 + $0x140] sm:$0xff]
    %v1125 = vld [vmem:[#allocation11 + $0x148] sm:$0xff]
    %v1126 = vld [vmem:[#allocation11 + $0x150] sm:$0xff]
    %v1127 = vld [vmem:[#allocation11 + $0x158] sm:$0xff]
    %v1128 = vld [vmem:[#allocation11 + $0x160] sm:$0xff]
    %v1129 = vld [vmem:[#allocation11 + $0x168] sm:$0xff]
    %v1130 = vld [vmem:[#allocation11 + $0x170] sm:$0xff]
    %v1131 = vld [vmem:[#allocation11 + $0x178] sm:$0xff]
    %v1132 = vld [vmem:[#allocation11 + $0x180] sm:$0xff]
    %v1133 = vld [vmem:[#allocation11 + $0x188] sm:$0xff]
    %v1134 = vld [vmem:[#allocation11 + $0x190] sm:$0xff]
    %v1135 = vld [vmem:[#allocation11 + $0x198] sm:$0xff]
    %v1136 = vld [vmem:[#allocation11 + $0x1a0] sm:$0xff]
    %v1137 = vld [vmem:[#allocation11 + $0x1a8] sm:$0xff]
    %v1138 = vld [vmem:[#allocation11 + $0x1b0] sm:$0xff]
    %v1139 = vld [vmem:[#allocation11 + $0x1b8] sm:$0xff]
    %v1140 = vld [vmem:[#allocation11 + $0x1c0] sm:$0xff]
    %v1141 = vld [vmem:[#allocation11 + $0x1c8] sm:$0xff]
    %v1142 = vld [vmem:[#allocation11 + $0x1d0] sm:$0xff]
    %v1143 = vld [vmem:[#allocation11 + $0x1d8] sm:$0xff]
    %v1144 = vld [vmem:[#allocation11 + $0x1e0] sm:$0xff]
    %v1145 = vld [vmem:[#allocation11 + $0x1e8] sm:$0xff]
    %v1146 = vld [vmem:[#allocation11 + $0x1f0] sm:$0xff]
    %v1147 = vld [vmem:[#allocation11 + $0x1f8] sm:$0xff]
    %v1148 = vld [vmem:[%s9] sm:$0xff]
    %v1150 = vlaneseq
    %v1151 = vshrl.u32 %v1150, 7
    %v1152 = vsub.s32 0, %v1151
    %v1153 = vrot.slane %v1148, %v1152
    %v1154 = vlaneseq
    %v1155 = vshrl.u32 %v1154, 7
    %v1156 = vsub.s32 1, %v1155
    %v1157 = vrot.slane %v1148, %v1156
    %v1158 = vlaneseq
    %v1159 = vshrl.u32 %v1158, 7
    %v1160 = vsub.s32 2, %v1159
    %v1161 = vrot.slane %v1148, %v1160
    %v1162 = vlaneseq
    %v1163 = vshrl.u32 %v1162, 7
    %v1164 = vsub.s32 3, %v1163
    %v1165 = vrot.slane %v1148, %v1164
    %v1166 = vlaneseq
    %v1167 = vshrl.u32 %v1166, 7
    %v1168 = vsub.s32 4, %v1167
    %v1169 = vrot.slane %v1148, %v1168
    %v1170 = vlaneseq
    %v1171 = vshrl.u32 %v1170, 7
    %v1172 = vsub.s32 5, %v1171
    %v1173 = vrot.slane %v1148, %v1172
    %v1174 = vlaneseq
    %v1175 = vshrl.u32 %v1174, 7
    %v1176 = vsub.s32 6, %v1175
    %v1177 = vrot.slane %v1148, %v1176
    %v1178 = vlaneseq
    %v1179 = vshrl.u32 %v1178, 7
    %v1180 = vsub.s32 7, %v1179
    %v1181 = vrot.slane %v1148, %v1180
    %v1254 = vunpack.c.l.b16 %v1084
    %v1255 = vunpack.c.h.b16 %v1084
    %v1256 = vunpack.c.l.b16 %v1085
    %v1257 = vunpack.c.h.b16 %v1085
    %v1258 = vunpack.c.l.b16 %v1086
    %v1259 = vunpack.c.h.b16 %v1086
    %v1260 = vunpack.c.l.b16 %v1087
    %v1261 = vunpack.c.h.b16 %v1087
    %v1262 = vunpack.c.l.b16 %v1088
    %v1263 = vunpack.c.h.b16 %v1088
    %v1264 = vunpack.c.l.b16 %v1089
    %v1265 = vunpack.c.h.b16 %v1089
    %v1266 = vunpack.c.l.b16 %v1090
    %v1267 = vunpack.c.h.b16 %v1090
    %v1268 = vunpack.c.l.b16 %v1091
    %v1269 = vunpack.c.h.b16 %v1091
    %v1270 = vunpack.c.l.b16 %v1092
    %v1271 = vunpack.c.h.b16 %v1092
    %v1272 = vunpack.c.l.b16 %v1093
    %v1273 = vunpack.c.h.b16 %v1093
    %v1274 = vunpack.c.l.b16 %v1094
    %v1275 = vunpack.c.h.b16 %v1094
    %v1276 = vunpack.c.l.b16 %v1095
    %v1277 = vunpack.c.h.b16 %v1095
    %v1278 = vunpack.c.l.b16 %v1096
    %v1279 = vunpack.c.h.b16 %v1096
    %v1280 = vunpack.c.l.b16 %v1097
    %v1281 = vunpack.c.h.b16 %v1097
    %v1282 = vunpack.c.l.b16 %v1098
    %v1283 = vunpack.c.h.b16 %v1098
    %v1284 = vunpack.c.l.b16 %v1099
    %v1285 = vunpack.c.h.b16 %v1099
    %v1286 = vunpack.c.l.b16 %v1100
    %v1287 = vunpack.c.h.b16 %v1100
    %v1288 = vunpack.c.l.b16 %v1101
    %v1289 = vunpack.c.h.b16 %v1101
    %v1290 = vunpack.c.l.b16 %v1102
    %v1291 = vunpack.c.h.b16 %v1102
    %v1292 = vunpack.c.l.b16 %v1103
    %v1293 = vunpack.c.h.b16 %v1103
    %v1294 = vunpack.c.l.b16 %v1104
    %v1295 = vunpack.c.h.b16 %v1104
    %v1296 = vunpack.c.l.b16 %v1105
    %v1297 = vunpack.c.h.b16 %v1105
    %v1298 = vunpack.c.l.b16 %v1106
    %v1299 = vunpack.c.h.b16 %v1106
    %v1300 = vunpack.c.l.b16 %v1107
    %v1301 = vunpack.c.h.b16 %v1107
    %v1302 = vunpack.c.l.b16 %v1108
    %v1303 = vunpack.c.h.b16 %v1108
    %v1304 = vunpack.c.l.b16 %v1109
    %v1305 = vunpack.c.h.b16 %v1109
    %v1306 = vunpack.c.l.b16 %v1110
    %v1307 = vunpack.c.h.b16 %v1110
    %v1308 = vunpack.c.l.b16 %v1111
    %v1309 = vunpack.c.h.b16 %v1111
    %v1310 = vunpack.c.l.b16 %v1112
    %v1311 = vunpack.c.h.b16 %v1112
    %v1312 = vunpack.c.l.b16 %v1113
    %v1313 = vunpack.c.h.b16 %v1113
    %v1314 = vunpack.c.l.b16 %v1114
    %v1315 = vunpack.c.h.b16 %v1114
    %v1316 = vunpack.c.l.b16 %v1115
    %v1317 = vunpack.c.h.b16 %v1115
    %v1318 = vunpack.c.l.b16 %v1116
    %v1319 = vunpack.c.h.b16 %v1116
    %v1320 = vunpack.c.l.b16 %v1117
    %v1321 = vunpack.c.h.b16 %v1117
    %v1322 = vunpack.c.l.b16 %v1118
    %v1323 = vunpack.c.h.b16 %v1118
    %v1324 = vunpack.c.l.b16 %v1119
    %v1325 = vunpack.c.h.b16 %v1119
    %v1326 = vunpack.c.l.b16 %v1120
    %v1327 = vunpack.c.h.b16 %v1120
    %v1328 = vunpack.c.l.b16 %v1121
    %v1329 = vunpack.c.h.b16 %v1121
    %v1330 = vunpack.c.l.b16 %v1122
    %v1331 = vunpack.c.h.b16 %v1122
    %v1332 = vunpack.c.l.b16 %v1123
    %v1333 = vunpack.c.h.b16 %v1123
    %v1334 = vunpack.c.l.b16 %v1124
    %v1335 = vunpack.c.h.b16 %v1124
    %v1336 = vunpack.c.l.b16 %v1125
    %v1337 = vunpack.c.h.b16 %v1125
    %v1338 = vunpack.c.l.b16 %v1126
    %v1339 = vunpack.c.h.b16 %v1126
    %v1340 = vunpack.c.l.b16 %v1127
    %v1341 = vunpack.c.h.b16 %v1127
    %v1342 = vunpack.c.l.b16 %v1128
    %v1343 = vunpack.c.h.b16 %v1128
    %v1344 = vunpack.c.l.b16 %v1129
    %v1345 = vunpack.c.h.b16 %v1129
    %v1346 = vunpack.c.l.b16 %v1130
    %v1347 = vunpack.c.h.b16 %v1130
    %v1348 = vunpack.c.l.b16 %v1131
    %v1349 = vunpack.c.h.b16 %v1131
    %v1350 = vunpack.c.l.b16 %v1132
    %v1351 = vunpack.c.h.b16 %v1132
    %v1352 = vunpack.c.l.b16 %v1133
    %v1353 = vunpack.c.h.b16 %v1133
    %v1354 = vunpack.c.l.b16 %v1134
    %v1355 = vunpack.c.h.b16 %v1134
    %v1356 = vunpack.c.l.b16 %v1135
    %v1357 = vunpack.c.h.b16 %v1135
    %v1358 = vunpack.c.l.b16 %v1136
    %v1359 = vunpack.c.h.b16 %v1136
    %v1360 = vunpack.c.l.b16 %v1137
    %v1361 = vunpack.c.h.b16 %v1137
    %v1362 = vunpack.c.l.b16 %v1138
    %v1363 = vunpack.c.h.b16 %v1138
    %v1364 = vunpack.c.l.b16 %v1139
    %v1365 = vunpack.c.h.b16 %v1139
    %v1366 = vunpack.c.l.b16 %v1140
    %v1367 = vunpack.c.h.b16 %v1140
    %v1368 = vunpack.c.l.b16 %v1141
    %v1369 = vunpack.c.h.b16 %v1141
    %v1370 = vunpack.c.l.b16 %v1142
    %v1371 = vunpack.c.h.b16 %v1142
    %v1372 = vunpack.c.l.b16 %v1143
    %v1373 = vunpack.c.h.b16 %v1143
    %v1374 = vunpack.c.l.b16 %v1144
    %v1375 = vunpack.c.h.b16 %v1144
    %v1376 = vunpack.c.l.b16 %v1145
    %v1377 = vunpack.c.h.b16 %v1145
    %v1378 = vunpack.c.l.b16 %v1146
    %v1379 = vunpack.c.h.b16 %v1146
    %v1380 = vunpack.c.l.b16 %v1147
    %v1381 = vunpack.c.h.b16 %v1147
    %v1382 = vpack.c.b16 %v1262, %v1254
    %v1383 = vpack.c.b16 %v1263, %v1255
    %v1384 = vpack.c.b16 %v1264, %v1256
    %v1385 = vpack.c.b16 %v1265, %v1257
    %v1386 = vpack.c.b16 %v1266, %v1258
    %v1387 = vpack.c.b16 %v1267, %v1259
    %v1388 = vpack.c.b16 %v1268, %v1260
    %v1389 = vpack.c.b16 %v1269, %v1261
    %v1390 = vpack.c.b16 %v1278, %v1270
    %v1391 = vpack.c.b16 %v1279, %v1271
    %v1392 = vpack.c.b16 %v1280, %v1272
    %v1393 = vpack.c.b16 %v1281, %v1273
    %v1394 = vpack.c.b16 %v1282, %v1274
    %v1395 = vpack.c.b16 %v1283, %v1275
    %v1396 = vpack.c.b16 %v1284, %v1276
    %v1397 = vpack.c.b16 %v1285, %v1277
    %v1398 = vpack.c.b16 %v1294, %v1286
    %v1399 = vpack.c.b16 %v1295, %v1287
    %v1400 = vpack.c.b16 %v1296, %v1288
    %v1401 = vpack.c.b16 %v1297, %v1289
    %v1402 = vpack.c.b16 %v1298, %v1290
    %v1403 = vpack.c.b16 %v1299, %v1291
    %v1404 = vpack.c.b16 %v1300, %v1292
    %v1405 = vpack.c.b16 %v1301, %v1293
    %v1406 = vpack.c.b16 %v1310, %v1302
    %v1407 = vpack.c.b16 %v1311, %v1303
    %v1408 = vpack.c.b16 %v1312, %v1304
    %v1409 = vpack.c.b16 %v1313, %v1305
    %v1410 = vpack.c.b16 %v1314, %v1306
    %v1411 = vpack.c.b16 %v1315, %v1307
    %v1412 = vpack.c.b16 %v1316, %v1308
    %v1413 = vpack.c.b16 %v1317, %v1309
    %v1414 = vpack.c.b16 %v1326, %v1318
    %v1415 = vpack.c.b16 %v1327, %v1319
    %v1416 = vpack.c.b16 %v1328, %v1320
    %v1417 = vpack.c.b16 %v1329, %v1321
    %v1418 = vpack.c.b16 %v1330, %v1322
    %v1419 = vpack.c.b16 %v1331, %v1323
    %v1420 = vpack.c.b16 %v1332, %v1324
    %v1421 = vpack.c.b16 %v1333, %v1325
    %v1422 = vpack.c.b16 %v1342, %v1334
    %v1423 = vpack.c.b16 %v1343, %v1335
    %v1424 = vpack.c.b16 %v1344, %v1336
    %v1425 = vpack.c.b16 %v1345, %v1337
    %v1426 = vpack.c.b16 %v1346, %v1338
    %v1427 = vpack.c.b16 %v1347, %v1339
    %v1428 = vpack.c.b16 %v1348, %v1340
    %v1429 = vpack.c.b16 %v1349, %v1341
    %v1430 = vpack.c.b16 %v1358, %v1350
    %v1431 = vpack.c.b16 %v1359, %v1351
    %v1432 = vpack.c.b16 %v1360, %v1352
    %v1433 = vpack.c.b16 %v1361, %v1353
    %v1434 = vpack.c.b16 %v1362, %v1354
    %v1435 = vpack.c.b16 %v1363, %v1355
    %v1436 = vpack.c.b16 %v1364, %v1356
    %v1437 = vpack.c.b16 %v1365, %v1357
    %v1438 = vpack.c.b16 %v1374, %v1366
    %v1439 = vpack.c.b16 %v1375, %v1367
    %v1440 = vpack.c.b16 %v1376, %v1368
    %v1441 = vpack.c.b16 %v1377, %v1369
    %v1442 = vpack.c.b16 %v1378, %v1370
    %v1443 = vpack.c.b16 %v1379, %v1371
    %v1444 = vpack.c.b16 %v1380, %v1372
    %v1445 = vpack.c.b16 %v1381, %v1373
    %1510 = vmatprep.subr.bf16.mxu0 %v1439
    %1511 = vmatpush1.bf16.msra.mxu0 %v1438
    %1512 = vmatprep.subr.bf16.mxu0 %v1431
    %1513 = vmatpush1.bf16.msra.mxu0 %v1430
    %1514 = vmatprep.subr.bf16.mxu0 %v1423
    %1515 = vmatpush1.bf16.msra.mxu0 %v1422
    %1516 = vmatprep.subr.bf16.mxu0 %v1415
    %1517 = vmatpush1.bf16.msra.mxu0 %v1414
    %1518 = vmatprep.subr.bf16.mxu0 %v1407
    %1519 = vmatpush1.bf16.msra.mxu0 %v1406
    %1520 = vmatprep.subr.bf16.mxu0 %v1399
    %1521 = vmatpush1.bf16.msra.mxu0 %v1398
    %1522 = vmatprep.subr.bf16.mxu0 %v1391
    %1523 = vmatpush1.bf16.msra.mxu0 %v1390
    %1524 = vmatprep.subr.bf16.mxu0 %v1383
    %1525 = vmatpush1.bf16.msra.mxu0 %v1382
    %1526 = vmatprep.subr.bf16.mxu0 0
    %1527 = vmatpush2.bf16.msra.mxu0 0
    %1528 = vmatprep.subr.bf16.mxu0 0
    %1529 = vmatpush2.bf16.msra.mxu0 0
    %1530 = vmatprep.subr.bf16.mxu0 0
    %1531 = vmatpush2.bf16.msra.mxu0 0
    %1532 = vmatprep.subr.bf16.mxu0 0
    %1533 = vmatpush2.bf16.msra.mxu0 0
    %1534 = vmatprep.subr.bf16.mxu0 0
    %1535 = vmatpush2.bf16.msra.mxu0 0
    %1536 = vmatprep.subr.bf16.mxu0 0
    %1537 = vmatpush2.bf16.msra.mxu0 0
    %1538 = vmatprep.subr.bf16.mxu0 0
    %1539 = vmatpush2.bf16.msra.mxu0 0
    %1540 = vmatprep.subr.bf16.mxu0 0
    %1541 = vmatpush2.bf16.msra.mxu0 0
    %1542 = vmatprep.mubr.bf16.mxu0 0
    %1543 = vmatmul.mubr.bf16.gmra.mxu0 %v1083
    %v1544 = vpop.f32.mrf.mxu0
    %v1545 = vadd.f32 %v1153, %v1544
    %v1546 = vpop.f32.mrf.mxu0
    %v1547 = vadd.f32 %v1157, %v1546
    %v1548 = vpop.f32.mrf.mxu0
    %v1549 = vpop.f32.mrf.mxu0
    %1550 = vdwg.mxu0
    %1551 = vmatprep.subr.bf16.mxu0 %v1441
    %1552 = vmatpush1.bf16.msra.mxu0 %v1440
    %1553 = vmatprep.subr.bf16.mxu0 %v1433
    %1554 = vmatpush1.bf16.msra.mxu0 %v1432
    %1555 = vmatprep.subr.bf16.mxu0 %v1425
    %1556 = vmatpush1.bf16.msra.mxu0 %v1424
    %1557 = vmatprep.subr.bf16.mxu0 %v1417
    %1558 = vmatpush1.bf16.msra.mxu0 %v1416
    %1559 = vmatprep.subr.bf16.mxu0 %v1409
    %1560 = vmatpush1.bf16.msra.mxu0 %v1408
    %1561 = vmatprep.subr.bf16.mxu0 %v1401
    %1562 = vmatpush1.bf16.msra.mxu0 %v1400
    %1563 = vmatprep.subr.bf16.mxu0 %v1393
    %1564 = vmatpush1.bf16.msra.mxu0 %v1392
    %1565 = vmatprep.subr.bf16.mxu0 %v1385
    %1566 = vmatpush1.bf16.msra.mxu0 %v1384
    %1567 = vmatprep.subr.bf16.mxu0 0
    %1568 = vmatpush2.bf16.msra.mxu0 0
    %1569 = vmatprep.subr.bf16.mxu0 0
    %1570 = vmatpush2.bf16.msra.mxu0 0
    %1571 = vmatprep.subr.bf16.mxu0 0
    %1572 = vmatpush2.bf16.msra.mxu0 0
    %1573 = vmatprep.subr.bf16.mxu0 0
    %1574 = vmatpush2.bf16.msra.mxu0 0
    %1575 = vmatprep.subr.bf16.mxu0 0
    %1576 = vmatpush2.bf16.msra.mxu0 0
    %1577 = vmatprep.subr.bf16.mxu0 0
    %1578 = vmatpush2.bf16.msra.mxu0 0
    %1579 = vmatprep.subr.bf16.mxu0 0
    %1580 = vmatpush2.bf16.msra.mxu0 0
    %1581 = vmatprep.subr.bf16.mxu0 0
    %1582 = vmatpush2.bf16.msra.mxu0 0
    %1583 = vmatprep.mubr.bf16.mxu0 0
    %1584 = vmatmul.mubr.bf16.gmra.mxu0 %v1083
    %v1585 = vpop.f32.mrf.mxu0
    %v1586 = vadd.f32 %v1161, %v1585
    %v1587 = vpop.f32.mrf.mxu0
    %v1588 = vadd.f32 %v1165, %v1587
    %v1589 = vpop.f32.mrf.mxu0
    %v1590 = vpop.f32.mrf.mxu0
    %1591 = vdwg.mxu0
    %1592 = vmatprep.subr.bf16.mxu0 %v1443
    %1593 = vmatpush1.bf16.msra.mxu0 %v1442
    %1594 = vmatprep.subr.bf16.mxu0 %v1435
    %1595 = vmatpush1.bf16.msra.mxu0 %v1434
    %1596 = vmatprep.subr.bf16.mxu0 %v1427
    %1597 = vmatpush1.bf16.msra.mxu0 %v1426
    %1598 = vmatprep.subr.bf16.mxu0 %v1419
    %1599 = vmatpush1.bf16.msra.mxu0 %v1418
    %1600 = vmatprep.subr.bf16.mxu0 %v1411
    %1601 = vmatpush1.bf16.msra.mxu0 %v1410
    %1602 = vmatprep.subr.bf16.mxu0 %v1403
    %1603 = vmatpush1.bf16.msra.mxu0 %v1402
    %1604 = vmatprep.subr.bf16.mxu0 %v1395
    %1605 = vmatpush1.bf16.msra.mxu0 %v1394
    %1606 = vmatprep.subr.bf16.mxu0 %v1387
    %1607 = vmatpush1.bf16.msra.mxu0 %v1386
    %1608 = vmatprep.subr.bf16.mxu0 0
    %1609 = vmatpush2.bf16.msra.mxu0 0
    %1610 = vmatprep.subr.bf16.mxu0 0
    %1611 = vmatpush2.bf16.msra.mxu0 0
    %1612 = vmatprep.subr.bf16.mxu0 0
    %1613 = vmatpush2.bf16.msra.mxu0 0
    %1614 = vmatprep.subr.bf16.mxu0 0
    %1615 = vmatpush2.bf16.msra.mxu0 0
    %1616 = vmatprep.subr.bf16.mxu0 0
    %1617 = vmatpush2.bf16.msra.mxu0 0
    %1618 = vmatprep.subr.bf16.mxu0 0
    %1619 = vmatpush2.bf16.msra.mxu0 0
    %1620 = vmatprep.subr.bf16.mxu0 0
    %1621 = vmatpush2.bf16.msra.mxu0 0
    %1622 = vmatprep.subr.bf16.mxu0 0
    %1623 = vmatpush2.bf16.msra.mxu0 0
    %1624 = vmatprep.mubr.bf16.mxu0 0
    %1625 = vmatmul.mubr.bf16.gmra.mxu0 %v1083
    %v1626 = vpop.f32.mrf.mxu0
    %v1627 = vadd.f32 %v1169, %v1626
    %v1628 = vpop.f32.mrf.mxu0
    %v1629 = vadd.f32 %v1173, %v1628
    %v1630 = vpop.f32.mrf.mxu0
    %v1631 = vpop.f32.mrf.mxu0
    %1632 = vdwg.mxu0
    %1633 = vmatprep.subr.bf16.mxu0 %v1445
    %1634 = vmatpush1.bf16.msra.mxu0 %v1444
    %1635 = vmatprep.subr.bf16.mxu0 %v1437
    %1636 = vmatpush1.bf16.msra.mxu0 %v1436
    %1637 = vmatprep.subr.bf16.mxu0 %v1429
    %1638 = vmatpush1.bf16.msra.mxu0 %v1428
    %1639 = vmatprep.subr.bf16.mxu0 %v1421
    %1640 = vmatpush1.bf16.msra.mxu0 %v1420
    %1641 = vmatprep.subr.bf16.mxu0 %v1413
    %1642 = vmatpush1.bf16.msra.mxu0 %v1412
    %1643 = vmatprep.subr.bf16.mxu0 %v1405
    %1644 = vmatpush1.bf16.msra.mxu0 %v1404
    %1645 = vmatprep.subr.bf16.mxu0 %v1397
    %1646 = vmatpush1.bf16.msra.mxu0 %v1396
    %1647 = vmatprep.subr.bf16.mxu0 %v1389
    %1648 = vmatpush1.bf16.msra.mxu0 %v1388
    %1649 = vmatprep.subr.bf16.mxu0 0
    %1650 = vmatpush2.bf16.msra.mxu0 0
    %1651 = vmatprep.subr.bf16.mxu0 0
    %1652 = vmatpush2.bf16.msra.mxu0 0
    %1653 = vmatprep.subr.bf16.mxu0 0
    %1654 = vmatpush2.bf16.msra.mxu0 0
    %1655 = vmatprep.subr.bf16.mxu0 0
    %1656 = vmatpush2.bf16.msra.mxu0 0
    %1657 = vmatprep.subr.bf16.mxu0 0
    %1658 = vmatpush2.bf16.msra.mxu0 0
    %1659 = vmatprep.subr.bf16.mxu0 0
    %1660 = vmatpush2.bf16.msra.mxu0 0
    %1661 = vmatprep.subr.bf16.mxu0 0
    %1662 = vmatpush2.bf16.msra.mxu0 0
    %1663 = vmatprep.subr.bf16.mxu0 0
    %1664 = vmatpush2.bf16.msra.mxu0 0
    %1665 = vmatprep.mubr.bf16.mxu0 0
    %1666 = vmatmul.mubr.bf16.gmra.mxu0 %v1083
    %v1667 = vpop.f32.mrf.mxu0
    %v1668 = vadd.f32 %v1177, %v1667
    %v1669 = vpop.f32.mrf.mxu0
    %v1670 = vadd.f32 %v1181, %v1669
    %v1671 = vpop.f32.mrf.mxu0
    %v1672 = vpop.f32.mrf.mxu0
    %1673 = vdwg.mxu0
    %v1674 = vsub.f32 0.0, %v1545
    %v1675 = vsub.f32 0.0, %v1547
    %v1676 = vsub.f32 0.0, %v1586
    %v1677 = vsub.f32 0.0, %v1588
    %v1678 = vsub.f32 0.0, %v1627
    %v1679 = vsub.f32 0.0, %v1629
    %v1680 = vsub.f32 0.0, %v1668
    %v1681 = vsub.f32 0.0, %v1670
    %v1682 = vmul.f32 %v1674, 1.442695
    %v1683 = vpow.pop %v1682
    %v1684 = vmul.f32 %v1675, 1.442695
    %v1685 = vpow.pop %v1684
    %v1686 = vmul.f32 %v1676, 1.442695
    %v1687 = vpow.pop %v1686
    %v1688 = vmul.f32 %v1677, 1.442695
    %v1689 = vpow.pop %v1688
    %v1690 = vmul.f32 %v1678, 1.442695
    %v1691 = vpow.pop %v1690
    %v1692 = vmul.f32 %v1679, 1.442695
    %v1693 = vpow.pop %v1692
    %v1694 = vmul.f32 %v1680, 1.442695
    %v1695 = vpow.pop %v1694
    %v1696 = vmul.f32 %v1681, 1.442695
    %v1697 = vpow.pop %v1696
    %v1698 = vadd.f32 %v1683, 1.0
    %v1699 = vadd.f32 %v1685, 1.0
    %v1700 = vadd.f32 %v1687, 1.0
    %v1701 = vadd.f32 %v1689, 1.0
    %v1702 = vadd.f32 %v1691, 1.0
    %v1703 = vadd.f32 %v1693, 1.0
    %v1704 = vadd.f32 %v1695, 1.0
    %v1705 = vadd.f32 %v1697, 1.0
    %v1706 = vrcp.pop %v1698
    %v1707 = vrcp.pop %v1699
    %v1708 = vrcp.pop %v1700
    %v1709 = vrcp.pop %v1701
    %v1710 = vrcp.pop %v1702
    %v1711 = vrcp.pop %v1703
    %v1712 = vrcp.pop %v1704
    %v1713 = vrcp.pop %v1705
    %1714 = vst [vmem:[#allocation13] sm:$0xff] %v1706
    %1715 = vst [vmem:[#allocation13 + $0x8] sm:$0xff] %v1707
    %1716 = vst [vmem:[#allocation13 + $0x10] sm:$0xff] %v1708
    %1717 = vst [vmem:[#allocation13 + $0x18] sm:$0xff] %v1709
    %1718 = vst [vmem:[#allocation13 + $0x20] sm:$0xff] %v1710
    %1719 = vst [vmem:[#allocation13 + $0x28] sm:$0xff] %v1711
    %1720 = vst [vmem:[#allocation13 + $0x30] sm:$0xff] %v1712
    %1721 = vst [vmem:[#allocation13 + $0x38] sm:$0xff] %v1713
    %1722 = vst [vmem:[#allocation14] sm:$0xff] %v958
    %1723 = vst [vmem:[#allocation14 + $0x8] sm:$0xff] %v960
    // Predicated region
    $region66: #{tpu_custom_call.1} parent=1 // pred_check
      _
    $region67: #{tpu_custom_call.1} parent=1 // pred_check_branch
      %1725 = sbr.rel (0) target = $region69
    $region68: #{tpu_custom_call.1} parent=1 // pred_region
      %s1727 = ssub.s32 1024, 1024
      %1728 = vsyncadd [#allocation4], %s1727
      %s1730 = sshll.u32 [#allocation13], 4
      %s1731 = int_to_ptr.vmem [resolvable:$true] %s1730
      %1733 = dma.vmem_to_hbm [thread:$0]  %s1731, 1024, %s10, [#allocation4]
    $region69: #{tpu_custom_call.1} parent=1 // pred_fallthru
      _
    // Predicated region
    $region70: #{tpu_custom_call.1} parent=1 // pred_check
      _
    $region71: #{tpu_custom_call.1} parent=1 // pred_check_branch
      %1735 = sbr.rel (0) target = $region73
    $region72: #{tpu_custom_call.1} parent=1 // pred_region
      %s1737 = ssub.s32 256, 256
      %1738 = vsyncadd [#allocation15], %s1737
      %s1740 = sshll.u32 [#allocation14], 4
      %s1741 = int_to_ptr.vmem [resolvable:$true] %s1740
      %1743 = dma.vmem_to_hbm [thread:$0]  %s1741, 256, %s11, [#allocation15]
    $region73: #{tpu_custom_call.1} parent=1 // pred_fallthru
      _
    // Predicated region
    $region74: #{tpu_custom_call.1} parent=1 // pred_check
      _
    $region75: #{tpu_custom_call.1} parent=1 // pred_check_branch
      %1745 = sbr.rel (0) target = $region77
    $region76: #{tpu_custom_call.1} parent=1 // pred_region
      %1746 = dma.done [#allocation4], 1024
    $region77: #{tpu_custom_call.1} parent=1 // pred_fallthru
      _
    // Predicated region
    $region78: #{tpu_custom_call.1} parent=1 // pred_check
      _
    $region79: #{tpu_custom_call.1} parent=1 // pred_check_branch
      %1748 = sbr.rel (0) target = $region81
    $region80: #{tpu_custom_call.1} parent=1 // pred_region
      %1749 = dma.done [#allocation15], 256
    $region81: #{tpu_custom_call.1} parent=1 // pred_fallthru
      _
    %1750 = vsyncpa [#allocation3], 1
    %1751 = vsyncpa [#allocation6], 1
    %1752 = vsyncpa [#allocation9], 1
    %1753 = vsyncpa [#allocation12], 1
    %1754 = vsyncpa [#allocation4], 1
    %1755 = vsyncpa [#allocation15], 1

</llo_original>
